<compile_context>
chip_gen: v7x
topology: tpu7x:2x2x1
jax: 0.10.0
libtpu: 0.0.40
codegen_flags: <defaults>
</compile_context>

<pallas_src>
import functools

import jax
import jax.numpy as jnp
from jax import lax
from jax.experimental import pallas as pl
from jax.experimental.pallas import tpu as pltpu

LN_EPS = 1e-5  # PyTorch nn.LayerNorm default


def _prenorm_linear_kernel(x_ref, w_ref, bias_ref, o_ref):
    # x_ref: (tm, D) tile of the row-flattened input (no lane padding).
    d = x_ref.shape[-1]
    inv_d = jnp.float32(1.0 / d)

    # --- LayerNorm statistics in a single pass over the tile (f32) ---------
    xf = x_ref[...].astype(jnp.float32)
    s1 = jnp.sum(xf, axis=-1, keepdims=True)
    s2 = jnp.sum(xf * xf, axis=-1, keepdims=True)
    mean = s1 * inv_d
    var = jnp.maximum(s2 * inv_d - mean * mean, 0.0)   # guard f32 cancellation
    rstd = lax.rsqrt(var + LN_EPS)

    # Re-read x from the VMEM tile so the big f32 temporary does not have to
    # stay live across the reduction; gamma/beta are folded into w/bias.
    x_hat = (x_ref[...].astype(jnp.float32) - mean) * rstd

    # --- fn(x): Linear on the MXU, bf16 operands / f32 accumulation --------
    out = jnp.dot(x_hat.astype(jnp.bfloat16), w_ref[...],
                  preferred_element_type=jnp.float32)
    out = out + bias_ref[...].astype(jnp.float32)
    o_ref[...] = out.astype(o_ref.dtype)


def prenorm_forward(x, gamma, beta, w, bias, *, rows_per_block=1024):
    """x: (..., dim) -> (..., dim).  LayerNorm(dim), affine, then y @ w + bias."""
    orig_shape = x.shape
    D = int(orig_shape[-1])
    R = 1
    for s in orig_shape[:-1]:
        R *= int(s)

    # Row tile: big (amortizes ~0.35 us per grid step), multiple of 8 when it
    # is not the full row extent.  Last (lane) dim stays at the real D.
    if R <= rows_per_block:
        tm = R                                   # full extent -> no (8,) rule
    else:
        tm = max(8, (rows_per_block // 8) * 8)
    grid = (pl.cdiv(R, tm),)                     # partial last block is masked

    # Fold the LN affine into the linear layer (fn is linear):
    #   y @ w + b  with  y = x_hat * gamma + beta
    #   == x_hat @ (gamma[:, None] * w) + (beta @ w + b)
    gamma_f = gamma.reshape(D).astype(jnp.float32)
    beta_f = beta.reshape(D).astype(jnp.float32)
    w_f = w.astype(jnp.float32)
    w_folded = (gamma_f[:, None] * w_f).astype(jnp.bfloat16)          # (D, D)
    bias_folded = (beta_f @ w_f + bias.reshape(D).astype(jnp.float32)
                   ).reshape(1, D)                                     # (1, D)

    x2 = x.reshape(R, D)

    bytes_accessed = (
        R * D * x.dtype.itemsize        # x in
        + R * D * x.dtype.itemsize      # out
        + D * D * 2                     # bf16 weight
        + D * 4                         # f32 bias
    )
    cost = pl.CostEstimate(
        flops=2 * R * D * D + 6 * R * D,   # matmul + LN
        transcendentals=R,                 # one rsqrt per row
        bytes_accessed=bytes_accessed,
    )

    out2 = pl.pallas_call(
        _prenorm_linear_kernel,
        out_shape=jax.ShapeDtypeStruct((R, D), x.dtype),
        grid_spec=pltpu.PrefetchScalarGridSpec(
            num_scalar_prefetch=0,
            grid=grid,
            in_specs=[
                pl.BlockSpec((tm, D), lambda i: (i, 0)),   # x row tile
                pl.BlockSpec((D, D), lambda i: (0, 0)),    # folded weight
                pl.BlockSpec((1, D), lambda i: (0, 0)),    # folded bias
            ],
            out_specs=pl.BlockSpec((tm, D), lambda i: (i, 0)),
        ),
        compiler_params=pltpu.CompilerParams(
            dimension_semantics=("parallel",),
        ),
        cost_estimate=cost,
    )(x2, w_folded, bias_folded)

    return out2.reshape(orig_shape)


def _reference(x, gamma, beta, w, bias):
    # Pure-f32 reference matching the PyTorch module semantics:
    # nn.LayerNorm(dim) followed by Linear(dim, dim).
    xf = x.astype(jnp.float32)
    mean = jnp.mean(xf, axis=-1, keepdims=True)
    var = jnp.mean((xf - mean) ** 2, axis=-1, keepdims=True)
    x_hat = (xf - mean) / jnp.sqrt(var + LN_EPS)
    y = x_hat * gamma.astype(jnp.float32) + beta.astype(jnp.float32)
    out = y @ w.astype(jnp.float32) + bias.astype(jnp.float32)
    return out.astype(x.dtype)


if __name__ == "__main__":
    # Shapes consistent with HST: feature map [b, h, w, c] with c = dim = 28.
    B, H, W, D = 2, 16, 16, 28
    key = jax.random.PRNGKey(0)
    kx, kg, kb, kw, kbi = jax.random.split(key, 5)

    x = jax.random.normal(kx, (B, H, W, D), dtype=jnp.float32)

    # nn.LayerNorm(dim): weight=1, bias=0 at init -- perturb slightly so the
    # affine transform is exercised.
    gamma = jnp.ones((D,), jnp.float32) + 0.1 * jax.random.normal(kg, (D,), jnp.float32)
    beta = 0.1 * jax.random.normal(kb, (D,), jnp.float32)
    # fn = Linear(dim, dim)
    w = jax.random.normal(kw, (D, D), jnp.float32) * (1.0 / jnp.sqrt(D))
    bias = 0.1 * jax.random.normal(kbi, (D,), jnp.float32)

    out = prenorm_forward(x, gamma, beta, w, bias)
    out = jax.block_until_ready(out)

    ref = _reference(x, gamma, beta, w, bias)
    assert out.shape == (B, H, W, D)
    # bf16 MXU operands (with the LN affine folded into the weight) vs f32
    # reference -> allow bf16-level tolerance.
    assert jnp.allclose(out, ref, atol=2e-2, rtol=2e-2), "mismatch vs reference"

    print("KERNEL_OK")
</pallas_src>

<mosaic_0001>
module attributes {stable_mosaic.version = 11 : i64} {
  func.func @_prenorm_linear_kernel(%arg0: i32, %arg1: memref<512x28xf32, #tpu.memory_space<vmem>>, %arg2: memref<28x28xbf16, #tpu.memory_space<vmem>>, %arg3: memref<1x28xf32, #tpu.memory_space<vmem>>, %arg4: memref<512x28xf32, #tpu.memory_space<vmem>>) attributes {dimension_semantics = [#tpu.dimension_semantics<parallel>], iteration_bounds = array<i64: 1>, scalar_prefetch = 0 : i64, scratch_operands = 0 : i64, tpu.core_type = #tpu.core_type<tc>, window_params = [{transform_indices = @transform_0, window_bounds = array<i64: 512, 28>}, {pipeline_mode = #tpu.pipeline_mode<synchronous>, transform_indices = @transform_1, window_bounds = array<i64: 28, 28>}, {pipeline_mode = #tpu.pipeline_mode<synchronous>, transform_indices = @transform_2, window_bounds = array<i64: 1, 28>}, {transform_indices = @transform_3, window_bounds = array<i64: 512, 28>}]} {
    %c0 = arith.constant 0 : index
    %c0_0 = arith.constant 0 : index
    %0 = vector.load %arg1[%c0, %c0_0] : memref<512x28xf32, #tpu.memory_space<vmem>>, vector<512x28xf32>
    %cst = arith.constant dense<0.000000e+00> : vector<512xf32>
    %1 = vector.multi_reduction <add>, %0, %cst [1] : vector<512x28xf32> to vector<512xf32>
    %2 = vector.shape_cast %1 : vector<512xf32> to vector<512x1xf32>
    %3 = arith.mulf %0, %0 : vector<512x28xf32>
    %cst_1 = arith.constant dense<0.000000e+00> : vector<512xf32>
    %4 = vector.multi_reduction <add>, %3, %cst_1 [1] : vector<512x28xf32> to vector<512xf32>
    %5 = vector.shape_cast %4 : vector<512xf32> to vector<512x1xf32>
    %cst_2 = arith.constant 0.0357142873 : f32
    %6 = vector.broadcast %cst_2 : f32 to vector<512x1xf32>
    %7 = arith.mulf %2, %6 : vector<512x1xf32>
    %cst_3 = arith.constant 0.0357142873 : f32
    %8 = vector.broadcast %cst_3 : f32 to vector<512x1xf32>
    %9 = arith.mulf %5, %8 : vector<512x1xf32>
    %10 = arith.mulf %7, %7 : vector<512x1xf32>
    %11 = arith.subf %9, %10 : vector<512x1xf32>
    %cst_4 = arith.constant 0.000000e+00 : f32
    %12 = vector.broadcast %cst_4 : f32 to vector<512x1xf32>
    %13 = arith.maximumf %11, %12 : vector<512x1xf32>
    %cst_5 = arith.constant 9.99999974E-6 : f32
    %14 = vector.broadcast %cst_5 : f32 to vector<512x1xf32>
    %15 = arith.addf %13, %14 : vector<512x1xf32>
    %16 = math.rsqrt %15 : vector<512x1xf32>
    %c0_6 = arith.constant 0 : index
    %c0_7 = arith.constant 0 : index
    %17 = vector.load %arg1[%c0_6, %c0_7] : memref<512x28xf32, #tpu.memory_space<vmem>>, vector<512x28xf32>
    %18 = vector.broadcast %7 : vector<512x1xf32> to vector<512x28xf32>
    %19 = arith.subf %17, %18 : vector<512x28xf32>
    %20 = vector.broadcast %16 : vector<512x1xf32> to vector<512x28xf32>
    %21 = arith.mulf %19, %20 : vector<512x28xf32>
    %22 = arith.truncf %21 : vector<512x28xf32> to vector<512x28xbf16>
    %c0_8 = arith.constant 0 : index
    %c0_9 = arith.constant 0 : index
    %23 = vector.load %arg2[%c0_8, %c0_9] : memref<28x28xbf16, #tpu.memory_space<vmem>>, vector<28x28xbf16>
    %cst_10 = arith.constant dense<0.000000e+00> : vector<512x28xf32>
    %24 = tpu.matmul %22, %23, %cst_10 {dimension_numbers = #tpu.dot_dimension_numbers<[1], [0], [0], [1], [0, 0, 1, 1], [], []>} : vector<512x28xbf16>, vector<28x28xbf16>, vector<512x28xf32> -> vector<512x28xf32>
    %c0_11 = arith.constant 0 : index
    %c0_12 = arith.constant 0 : index
    %25 = vector.load %arg3[%c0_11, %c0_12] : memref<1x28xf32, #tpu.memory_space<vmem>>, vector<1x28xf32>
    %26 = vector.broadcast %25 : vector<1x28xf32> to vector<512x28xf32>
    %27 = arith.addf %24, %26 : vector<512x28xf32>
    %c0_13 = arith.constant 0 : index
    %c0_14 = arith.constant 0 : index
    %28 = vector.load %arg4[%c0_13, %c0_14] : memref<512x28xf32, #tpu.memory_space<vmem>>, vector<512x28xf32>
    tpu.vector_store %arg4[%c0_13, %c0_14], %27 {strides = array<i32>} : memref<512x28xf32, #tpu.memory_space<vmem>>, vector<512x28xf32>,
    return
  }
  func.func @transform_0(%arg0: i32) -> (i32, i32) {
    %c0_i32 = arith.constant 0 : i32
    %c0_i32_0 = arith.constant 0 : i32
    return %arg0, %c0_i32 : i32, i32
  }
  func.func @transform_1(%arg0: i32) -> (i32, i32) {
    %c0_i32 = arith.constant 0 : i32
    %c0_i32_0 = arith.constant 0 : i32
    %c0_i32_1 = arith.constant 0 : i32
    return %c0_i32, %c0_i32_0 : i32, i32
  }
  func.func @transform_2(%arg0: i32) -> (i32, i32) {
    %c0_i32 = arith.constant 0 : i32
    %c0_i32_0 = arith.constant 0 : i32
    %c0_i32_1 = arith.constant 0 : i32
    return %c0_i32, %c0_i32_0 : i32, i32
  }
  func.func @transform_3(%arg0: i32) -> (i32, i32) {
    %c0_i32 = arith.constant 0 : i32
    %c0_i32_0 = arith.constant 0 : i32
    return %arg0, %c0_i32 : i32, i32
  }
}

</mosaic_0001>

<llo_original>
// kernel: tpu_custom_call.1
$region0: #{tpu_custom_call.1}
  #allocation0 [shape = 'u32[]', space=smem, size = 0x4, offset = 0x4, fixed_abs, tag = 'smem constant byte address 0x4 - core index']
  #allocation1 [shape = 'u32[144,128]{1,0:T(1,128)}', space=vmem, size = 0x12000, scoped, tag = 'internal scratch']
  %s0 = inlined_call_operand.vmem [shape: f32[512,28], index: 0, kind: input, shape index: {}]
  %s1 = inlined_call_operand.vmem [shape: bf16[28,28], index: 1, kind: input, shape index: {}]
  %s2 = inlined_call_operand.vmem [shape: f32[1,28], index: 2, kind: input, shape index: {}]
  %s3 = inlined_call_operand.vmem [shape: f32[512,28], index: 3, kind: output, shape index: {}]
  %s4 = sld [smem:[#allocation0]]
  $region22: #{tpu_custom_call.1} parent=0
    _
  %s6 = ssub.s32 1, %s4
  %s7 = scalar_select 0, %s6, %s4
  // Predicated region
  $region2: #{tpu_custom_call.1} parent=0 // pred_check
    _
  $region3: #{tpu_custom_call.1} parent=0 // pred_check_branch
    %9 = sbr.rel (0) target = $region5
  $region4: #{tpu_custom_call.1} parent=0 // pred_region
    _
  $region5: #{tpu_custom_call.1} parent=0 // pred_fallthru
    _
  // Predicated region
  $region6: #{tpu_custom_call.1} parent=0 // pred_check
    _
  $region7: #{tpu_custom_call.1} parent=0 // pred_check_branch
    %11 = sbr.rel (0) target = $region9
  $region8: #{tpu_custom_call.1} parent=0 // pred_region
    _
  $region9: #{tpu_custom_call.1} parent=0 // pred_fallthru
    _
  // Predicated region
  $region10: #{tpu_custom_call.1} parent=0 // pred_check
    _
  $region11: #{tpu_custom_call.1} parent=0 // pred_check_branch
    %13 = sbr.rel (0) target = $region13
  $region12: #{tpu_custom_call.1} parent=0 // pred_region
    _
  $region13: #{tpu_custom_call.1} parent=0 // pred_fallthru
    _
  %v15 = vld [vmem:[%s0] sm:$0xff]
  %v16 = vld [vmem:[%s0 + $0x8] sm:$0xff]
  %v17 = vld [vmem:[%s0 + $0x10] sm:$0xff]
  %v18 = vld [vmem:[%s0 + $0x18] sm:$0xff]
  %v19 = vld [vmem:[%s0 + $0x20] sm:$0xff]
  %v20 = vld [vmem:[%s0 + $0x28] sm:$0xff]
  %v21 = vld [vmem:[%s0 + $0x30] sm:$0xff]
  %v22 = vld [vmem:[%s0 + $0x38] sm:$0xff]
  %v23 = vld [vmem:[%s0 + $0x40] sm:$0xff]
  %v24 = vld [vmem:[%s0 + $0x48] sm:$0xff]
  %v25 = vld [vmem:[%s0 + $0x50] sm:$0xff]
  %v26 = vld [vmem:[%s0 + $0x58] sm:$0xff]
  %v27 = vld [vmem:[%s0 + $0x60] sm:$0xff]
  %v28 = vld [vmem:[%s0 + $0x68] sm:$0xff]
  %v29 = vld [vmem:[%s0 + $0x70] sm:$0xff]
  %v30 = vld [vmem:[%s0 + $0x78] sm:$0xff]
  %v31 = vld [vmem:[%s0 + $0x80] sm:$0xff]
  %v32 = vld [vmem:[%s0 + $0x88] sm:$0xff]
  %v33 = vld [vmem:[%s0 + $0x90] sm:$0xff]
  %v34 = vld [vmem:[%s0 + $0x98] sm:$0xff]
  %v35 = vld [vmem:[%s0 + $0xa0] sm:$0xff]
  %v36 = vld [vmem:[%s0 + $0xa8] sm:$0xff]
  %v37 = vld [vmem:[%s0 + $0xb0] sm:$0xff]
  %v38 = vld [vmem:[%s0 + $0xb8] sm:$0xff]
  %v39 = vld [vmem:[%s0 + $0xc0] sm:$0xff]
  %v40 = vld [vmem:[%s0 + $0xc8] sm:$0xff]
  %v41 = vld [vmem:[%s0 + $0xd0] sm:$0xff]
  %v42 = vld [vmem:[%s0 + $0xd8] sm:$0xff]
  %v43 = vld [vmem:[%s0 + $0xe0] sm:$0xff]
  %v44 = vld [vmem:[%s0 + $0xe8] sm:$0xff]
  %v45 = vld [vmem:[%s0 + $0xf0] sm:$0xff]
  %v46 = vld [vmem:[%s0 + $0xf8] sm:$0xff]
  %v47 = vld [vmem:[%s0 + $0x100] sm:$0xff]
  %v48 = vld [vmem:[%s0 + $0x108] sm:$0xff]
  %v49 = vld [vmem:[%s0 + $0x110] sm:$0xff]
  %v50 = vld [vmem:[%s0 + $0x118] sm:$0xff]
  %v51 = vld [vmem:[%s0 + $0x120] sm:$0xff]
  %v52 = vld [vmem:[%s0 + $0x128] sm:$0xff]
  %v53 = vld [vmem:[%s0 + $0x130] sm:$0xff]
  %v54 = vld [vmem:[%s0 + $0x138] sm:$0xff]
  %v55 = vld [vmem:[%s0 + $0x140] sm:$0xff]
  %v56 = vld [vmem:[%s0 + $0x148] sm:$0xff]
  %v57 = vld [vmem:[%s0 + $0x150] sm:$0xff]
  %v58 = vld [vmem:[%s0 + $0x158] sm:$0xff]
  %v59 = vld [vmem:[%s0 + $0x160] sm:$0xff]
  %v60 = vld [vmem:[%s0 + $0x168] sm:$0xff]
  %v61 = vld [vmem:[%s0 + $0x170] sm:$0xff]
  %v62 = vld [vmem:[%s0 + $0x178] sm:$0xff]
  %v63 = vld [vmem:[%s0 + $0x180] sm:$0xff]
  %v64 = vld [vmem:[%s0 + $0x188] sm:$0xff]
  %v65 = vld [vmem:[%s0 + $0x190] sm:$0xff]
  %v66 = vld [vmem:[%s0 + $0x198] sm:$0xff]
  %v67 = vld [vmem:[%s0 + $0x1a0] sm:$0xff]
  %v68 = vld [vmem:[%s0 + $0x1a8] sm:$0xff]
  %v69 = vld [vmem:[%s0 + $0x1b0] sm:$0xff]
  %v70 = vld [vmem:[%s0 + $0x1b8] sm:$0xff]
  %v71 = vld [vmem:[%s0 + $0x1c0] sm:$0xff]
  %v72 = vld [vmem:[%s0 + $0x1c8] sm:$0xff]
  %v73 = vld [vmem:[%s0 + $0x1d0] sm:$0xff]
  %v74 = vld [vmem:[%s0 + $0x1d8] sm:$0xff]
  %v75 = vld [vmem:[%s0 + $0x1e0] sm:$0xff]
  %v76 = vld [vmem:[%s0 + $0x1e8] sm:$0xff]
  %v77 = vld [vmem:[%s0 + $0x1f0] sm:$0xff]
  %v78 = vld [vmem:[%s0 + $0x1f8] sm:$0xff]
  %vm79 = vcmask 228352
  %v80 = vsel %vm79, %v15, 0.0
  %81 = vadd.xlane.f32.xlu0 %v80
  %v82 = vpop.xlane.xlu0 %81
  %v83 = vsel %vm79, %v16, 0.0
  %84 = vadd.xlane.f32.xlu0 %v83
  %v85 = vpop.xlane.xlu0 %84
  %v86 = vsel %vm79, %v17, 0.0
  %87 = vadd.xlane.f32.xlu0 %v86
  %v88 = vpop.xlane.xlu0 %87
  %v89 = vsel %vm79, %v18, 0.0
  %90 = vadd.xlane.f32.xlu0 %v89
  %v91 = vpop.xlane.xlu0 %90
  %v92 = vsel %vm79, %v19, 0.0
  %93 = vadd.xlane.f32.xlu0 %v92
  %v94 = vpop.xlane.xlu0 %93
  %v95 = vsel %vm79, %v20, 0.0
  %96 = vadd.xlane.f32.xlu0 %v95
  %v97 = vpop.xlane.xlu0 %96
  %v98 = vsel %vm79, %v21, 0.0
  %99 = vadd.xlane.f32.xlu0 %v98
  %v100 = vpop.xlane.xlu0 %99
  %v101 = vsel %vm79, %v22, 0.0
  %102 = vadd.xlane.f32.xlu0 %v101
  %v103 = vpop.xlane.xlu0 %102
  %v104 = vsel %vm79, %v23, 0.0
  %105 = vadd.xlane.f32.xlu0 %v104
  %v106 = vpop.xlane.xlu0 %105
  %v107 = vsel %vm79, %v24, 0.0
  %108 = vadd.xlane.f32.xlu0 %v107
  %v109 = vpop.xlane.xlu0 %108
  %v110 = vsel %vm79, %v25, 0.0
  %111 = vadd.xlane.f32.xlu0 %v110
  %v112 = vpop.xlane.xlu0 %111
  %v113 = vsel %vm79, %v26, 0.0
  %114 = vadd.xlane.f32.xlu0 %v113
  %v115 = vpop.xlane.xlu0 %114
  %v116 = vsel %vm79, %v27, 0.0
  %117 = vadd.xlane.f32.xlu0 %v116
  %v118 = vpop.xlane.xlu0 %117
  %v119 = vsel %vm79, %v28, 0.0
  %120 = vadd.xlane.f32.xlu0 %v119
  %v121 = vpop.xlane.xlu0 %120
  %v122 = vsel %vm79, %v29, 0.0
  %123 = vadd.xlane.f32.xlu0 %v122
  %v124 = vpop.xlane.xlu0 %123
  %v125 = vsel %vm79, %v30, 0.0
  %126 = vadd.xlane.f32.xlu0 %v125
  %v127 = vpop.xlane.xlu0 %126
  %v128 = vsel %vm79, %v31, 0.0
  %129 = vadd.xlane.f32.xlu0 %v128
  %v130 = vpop.xlane.xlu0 %129
  %v131 = vsel %vm79, %v32, 0.0
  %132 = vadd.xlane.f32.xlu0 %v131
  %v133 = vpop.xlane.xlu0 %132
  %v134 = vsel %vm79, %v33, 0.0
  %135 = vadd.xlane.f32.xlu0 %v134
  %v136 = vpop.xlane.xlu0 %135
  %v137 = vsel %vm79, %v34, 0.0
  %138 = vadd.xlane.f32.xlu0 %v137
  %v139 = vpop.xlane.xlu0 %138
  %v140 = vsel %vm79, %v35, 0.0
  %141 = vadd.xlane.f32.xlu0 %v140
  %v142 = vpop.xlane.xlu0 %141
  %v143 = vsel %vm79, %v36, 0.0
  %144 = vadd.xlane.f32.xlu0 %v143
  %v145 = vpop.xlane.xlu0 %144
  %v146 = vsel %vm79, %v37, 0.0
  %147 = vadd.xlane.f32.xlu0 %v146
  %v148 = vpop.xlane.xlu0 %147
  %v149 = vsel %vm79, %v38, 0.0
  %150 = vadd.xlane.f32.xlu0 %v149
  %v151 = vpop.xlane.xlu0 %150
  %v152 = vsel %vm79, %v39, 0.0
  %153 = vadd.xlane.f32.xlu0 %v152
  %v154 = vpop.xlane.xlu0 %153
  %v155 = vsel %vm79, %v40, 0.0
  %156 = vadd.xlane.f32.xlu0 %v155
  %v157 = vpop.xlane.xlu0 %156
  %v158 = vsel %vm79, %v41, 0.0
  %159 = vadd.xlane.f32.xlu0 %v158
  %v160 = vpop.xlane.xlu0 %159
  %v161 = vsel %vm79, %v42, 0.0
  %162 = vadd.xlane.f32.xlu0 %v161
  %v163 = vpop.xlane.xlu0 %162
  %v164 = vsel %vm79, %v43, 0.0
  %165 = vadd.xlane.f32.xlu0 %v164
  %v166 = vpop.xlane.xlu0 %165
  %v167 = vsel %vm79, %v44, 0.0
  %168 = vadd.xlane.f32.xlu0 %v167
  %v169 = vpop.xlane.xlu0 %168
  %v170 = vsel %vm79, %v45, 0.0
  %171 = vadd.xlane.f32.xlu0 %v170
  %v172 = vpop.xlane.xlu0 %171
  %v173 = vsel %vm79, %v46, 0.0
  %174 = vadd.xlane.f32.xlu0 %v173
  %v175 = vpop.xlane.xlu0 %174
  %v176 = vsel %vm79, %v47, 0.0
  %177 = vadd.xlane.f32.xlu0 %v176
  %v178 = vpop.xlane.xlu0 %177
  %v179 = vsel %vm79, %v48, 0.0
  %180 = vadd.xlane.f32.xlu0 %v179
  %v181 = vpop.xlane.xlu0 %180
  %v182 = vsel %vm79, %v49, 0.0
  %183 = vadd.xlane.f32.xlu0 %v182
  %v184 = vpop.xlane.xlu0 %183
  %v185 = vsel %vm79, %v50, 0.0
  %186 = vadd.xlane.f32.xlu0 %v185
  %v187 = vpop.xlane.xlu0 %186
  %v188 = vsel %vm79, %v51, 0.0
  %189 = vadd.xlane.f32.xlu0 %v188
  %v190 = vpop.xlane.xlu0 %189
  %v191 = vsel %vm79, %v52, 0.0
  %192 = vadd.xlane.f32.xlu0 %v191
  %v193 = vpop.xlane.xlu0 %192
  %v194 = vsel %vm79, %v53, 0.0
  %195 = vadd.xlane.f32.xlu0 %v194
  %v196 = vpop.xlane.xlu0 %195
  %v197 = vsel %vm79, %v54, 0.0
  %198 = vadd.xlane.f32.xlu0 %v197
  %v199 = vpop.xlane.xlu0 %198
  %v200 = vsel %vm79, %v55, 0.0
  %201 = vadd.xlane.f32.xlu0 %v200
  %v202 = vpop.xlane.xlu0 %201
  %v203 = vsel %vm79, %v56, 0.0
  %204 = vadd.xlane.f32.xlu0 %v203
  %v205 = vpop.xlane.xlu0 %204
  %v206 = vsel %vm79, %v57, 0.0
  %207 = vadd.xlane.f32.xlu0 %v206
  %v208 = vpop.xlane.xlu0 %207
  %v209 = vsel %vm79, %v58, 0.0
  %210 = vadd.xlane.f32.xlu0 %v209
  %v211 = vpop.xlane.xlu0 %210
  %v212 = vsel %vm79, %v59, 0.0
  %213 = vadd.xlane.f32.xlu0 %v212
  %v214 = vpop.xlane.xlu0 %213
  %v215 = vsel %vm79, %v60, 0.0
  %216 = vadd.xlane.f32.xlu0 %v215
  %v217 = vpop.xlane.xlu0 %216
  %v218 = vsel %vm79, %v61, 0.0
  %219 = vadd.xlane.f32.xlu0 %v218
  %v220 = vpop.xlane.xlu0 %219
  %v221 = vsel %vm79, %v62, 0.0
  %222 = vadd.xlane.f32.xlu0 %v221
  %v223 = vpop.xlane.xlu0 %222
  %v224 = vsel %vm79, %v63, 0.0
  %225 = vadd.xlane.f32.xlu0 %v224
  %v226 = vpop.xlane.xlu0 %225
  %v227 = vsel %vm79, %v64, 0.0
  %228 = vadd.xlane.f32.xlu0 %v227
  %v229 = vpop.xlane.xlu0 %228
  %v230 = vsel %vm79, %v65, 0.0
  %231 = vadd.xlane.f32.xlu0 %v230
  %v232 = vpop.xlane.xlu0 %231
  %v233 = vsel %vm79, %v66, 0.0
  %234 = vadd.xlane.f32.xlu0 %v233
  %v235 = vpop.xlane.xlu0 %234
  %v236 = vsel %vm79, %v67, 0.0
  %237 = vadd.xlane.f32.xlu0 %v236
  %v238 = vpop.xlane.xlu0 %237
  %v239 = vsel %vm79, %v68, 0.0
  %240 = vadd.xlane.f32.xlu0 %v239
  %v241 = vpop.xlane.xlu0 %240
  %v242 = vsel %vm79, %v69, 0.0
  %243 = vadd.xlane.f32.xlu0 %v242
  %v244 = vpop.xlane.xlu0 %243
  %v245 = vsel %vm79, %v70, 0.0
  %246 = vadd.xlane.f32.xlu0 %v245
  %v247 = vpop.xlane.xlu0 %246
  %v248 = vsel %vm79, %v71, 0.0
  %249 = vadd.xlane.f32.xlu0 %v248
  %v250 = vpop.xlane.xlu0 %249
  %v251 = vsel %vm79, %v72, 0.0
  %252 = vadd.xlane.f32.xlu0 %v251
  %v253 = vpop.xlane.xlu0 %252
  %v254 = vsel %vm79, %v73, 0.0
  %255 = vadd.xlane.f32.xlu0 %v254
  %v256 = vpop.xlane.xlu0 %255
  %v257 = vsel %vm79, %v74, 0.0
  %258 = vadd.xlane.f32.xlu0 %v257
  %v259 = vpop.xlane.xlu0 %258
  %v260 = vsel %vm79, %v75, 0.0
  %261 = vadd.xlane.f32.xlu0 %v260
  %v262 = vpop.xlane.xlu0 %261
  %v263 = vsel %vm79, %v76, 0.0
  %264 = vadd.xlane.f32.xlu0 %v263
  %v265 = vpop.xlane.xlu0 %264
  %v266 = vsel %vm79, %v77, 0.0
  %267 = vadd.xlane.f32.xlu0 %v266
  %v268 = vpop.xlane.xlu0 %267
  %v269 = vsel %vm79, %v78, 0.0
  %270 = vadd.xlane.f32.xlu0 %v269
  %v271 = vpop.xlane.xlu0 %270
  %v272 = vmul.f32 %v15, %v15
  %v273 = vmul.f32 %v16, %v16
  %v274 = vmul.f32 %v17, %v17
  %v275 = vmul.f32 %v18, %v18
  %v276 = vmul.f32 %v19, %v19
  %v277 = vmul.f32 %v20, %v20
  %v278 = vmul.f32 %v21, %v21
  %v279 = vmul.f32 %v22, %v22
  %v280 = vmul.f32 %v23, %v23
  %v281 = vmul.f32 %v24, %v24
  %v282 = vmul.f32 %v25, %v25
  %v283 = vmul.f32 %v26, %v26
  %v284 = vmul.f32 %v27, %v27
  %v285 = vmul.f32 %v28, %v28
  %v286 = vmul.f32 %v29, %v29
  %v287 = vmul.f32 %v30, %v30
  %v288 = vmul.f32 %v31, %v31
  %v289 = vmul.f32 %v32, %v32
  %v290 = vmul.f32 %v33, %v33
  %v291 = vmul.f32 %v34, %v34
  %v292 = vmul.f32 %v35, %v35
  %v293 = vmul.f32 %v36, %v36
  %v294 = vmul.f32 %v37, %v37
  %v295 = vmul.f32 %v38, %v38
  %v296 = vmul.f32 %v39, %v39
  %v297 = vmul.f32 %v40, %v40
  %v298 = vmul.f32 %v41, %v41
  %v299 = vmul.f32 %v42, %v42
  %v300 = vmul.f32 %v43, %v43
  %v301 = vmul.f32 %v44, %v44
  %v302 = vmul.f32 %v45, %v45
  %v303 = vmul.f32 %v46, %v46
  %v304 = vmul.f32 %v47, %v47
  %v305 = vmul.f32 %v48, %v48
  %v306 = vmul.f32 %v49, %v49
  %v307 = vmul.f32 %v50, %v50
  %v308 = vmul.f32 %v51, %v51
  %v309 = vmul.f32 %v52, %v52
  %v310 = vmul.f32 %v53, %v53
  %v311 = vmul.f32 %v54, %v54
  %v312 = vmul.f32 %v55, %v55
  %v313 = vmul.f32 %v56, %v56
  %v314 = vmul.f32 %v57, %v57
  %v315 = vmul.f32 %v58, %v58
  %v316 = vmul.f32 %v59, %v59
  %v317 = vmul.f32 %v60, %v60
  %v318 = vmul.f32 %v61, %v61
  %v319 = vmul.f32 %v62, %v62
  %v320 = vmul.f32 %v63, %v63
  %v321 = vmul.f32 %v64, %v64
  %v322 = vmul.f32 %v65, %v65
  %v323 = vmul.f32 %v66, %v66
  %v324 = vmul.f32 %v67, %v67
  %v325 = vmul.f32 %v68, %v68
  %v326 = vmul.f32 %v69, %v69
  %v327 = vmul.f32 %v70, %v70
  %v328 = vmul.f32 %v71, %v71
  %v329 = vmul.f32 %v72, %v72
  %v330 = vmul.f32 %v73, %v73
  %v331 = vmul.f32 %v74, %v74
  %v332 = vmul.f32 %v75, %v75
  %v333 = vmul.f32 %v76, %v76
  %v334 = vmul.f32 %v77, %v77
  %v335 = vmul.f32 %v78, %v78
  %v336 = vsel %vm79, %v272, 0.0
  %337 = vadd.xlane.f32.xlu0 %v336
  %v338 = vpop.xlane.xlu0 %337
  %v339 = vsel %vm79, %v273, 0.0
  %340 = vadd.xlane.f32.xlu0 %v339
  %v341 = vpop.xlane.xlu0 %340
  %v342 = vsel %vm79, %v274, 0.0
  %343 = vadd.xlane.f32.xlu0 %v342
  %v344 = vpop.xlane.xlu0 %343
  %v345 = vsel %vm79, %v275, 0.0
  %346 = vadd.xlane.f32.xlu0 %v345
  %v347 = vpop.xlane.xlu0 %346
  %v348 = vsel %vm79, %v276, 0.0
  %349 = vadd.xlane.f32.xlu0 %v348
  %v350 = vpop.xlane.xlu0 %349
  %v351 = vsel %vm79, %v277, 0.0
  %352 = vadd.xlane.f32.xlu0 %v351
  %v353 = vpop.xlane.xlu0 %352
  %v354 = vsel %vm79, %v278, 0.0
  %355 = vadd.xlane.f32.xlu0 %v354
  %v356 = vpop.xlane.xlu0 %355
  %v357 = vsel %vm79, %v279, 0.0
  %358 = vadd.xlane.f32.xlu0 %v357
  %v359 = vpop.xlane.xlu0 %358
  %v360 = vsel %vm79, %v280, 0.0
  %361 = vadd.xlane.f32.xlu0 %v360
  %v362 = vpop.xlane.xlu0 %361
  %v363 = vsel %vm79, %v281, 0.0
  %364 = vadd.xlane.f32.xlu0 %v363
  %v365 = vpop.xlane.xlu0 %364
  %v366 = vsel %vm79, %v282, 0.0
  %367 = vadd.xlane.f32.xlu0 %v366
  %v368 = vpop.xlane.xlu0 %367
  %v369 = vsel %vm79, %v283, 0.0
  %370 = vadd.xlane.f32.xlu0 %v369
  %v371 = vpop.xlane.xlu0 %370
  %v372 = vsel %vm79, %v284, 0.0
  %373 = vadd.xlane.f32.xlu0 %v372
  %v374 = vpop.xlane.xlu0 %373
  %v375 = vsel %vm79, %v285, 0.0
  %376 = vadd.xlane.f32.xlu0 %v375
  %v377 = vpop.xlane.xlu0 %376
  %v378 = vsel %vm79, %v286, 0.0
  %379 = vadd.xlane.f32.xlu0 %v378
  %v380 = vpop.xlane.xlu0 %379
  %v381 = vsel %vm79, %v287, 0.0
  %382 = vadd.xlane.f32.xlu0 %v381
  %v383 = vpop.xlane.xlu0 %382
  %v384 = vsel %vm79, %v288, 0.0
  %385 = vadd.xlane.f32.xlu0 %v384
  %v386 = vpop.xlane.xlu0 %385
  %v387 = vsel %vm79, %v289, 0.0
  %388 = vadd.xlane.f32.xlu0 %v387
  %v389 = vpop.xlane.xlu0 %388
  %v390 = vsel %vm79, %v290, 0.0
  %391 = vadd.xlane.f32.xlu0 %v390
  %v392 = vpop.xlane.xlu0 %391
  %v393 = vsel %vm79, %v291, 0.0
  %394 = vadd.xlane.f32.xlu0 %v393
  %v395 = vpop.xlane.xlu0 %394
  %v396 = vsel %vm79, %v292, 0.0
  %397 = vadd.xlane.f32.xlu0 %v396
  %v398 = vpop.xlane.xlu0 %397
  %v399 = vsel %vm79, %v293, 0.0
  %400 = vadd.xlane.f32.xlu0 %v399
  %v401 = vpop.xlane.xlu0 %400
  %v402 = vsel %vm79, %v294, 0.0
  %403 = vadd.xlane.f32.xlu0 %v402
  %v404 = vpop.xlane.xlu0 %403
  %v405 = vsel %vm79, %v295, 0.0
  %406 = vadd.xlane.f32.xlu0 %v405
  %v407 = vpop.xlane.xlu0 %406
  %v408 = vsel %vm79, %v296, 0.0
  %409 = vadd.xlane.f32.xlu0 %v408
  %v410 = vpop.xlane.xlu0 %409
  %v411 = vsel %vm79, %v297, 0.0
  %412 = vadd.xlane.f32.xlu0 %v411
  %v413 = vpop.xlane.xlu0 %412
  %v414 = vsel %vm79, %v298, 0.0
  %415 = vadd.xlane.f32.xlu0 %v414
  %v416 = vpop.xlane.xlu0 %415
  %v417 = vsel %vm79, %v299, 0.0
  %418 = vadd.xlane.f32.xlu0 %v417
  %v419 = vpop.xlane.xlu0 %418
  %v420 = vsel %vm79, %v300, 0.0
  %421 = vadd.xlane.f32.xlu0 %v420
  %v422 = vpop.xlane.xlu0 %421
  %v423 = vsel %vm79, %v301, 0.0
  %424 = vadd.xlane.f32.xlu0 %v423
  %v425 = vpop.xlane.xlu0 %424
  %v426 = vsel %vm79, %v302, 0.0
  %427 = vadd.xlane.f32.xlu0 %v426
  %v428 = vpop.xlane.xlu0 %427
  %v429 = vsel %vm79, %v303, 0.0
  %430 = vadd.xlane.f32.xlu0 %v429
  %v431 = vpop.xlane.xlu0 %430
  %v432 = vsel %vm79, %v304, 0.0
  %433 = vadd.xlane.f32.xlu0 %v432
  %v434 = vpop.xlane.xlu0 %433
  %v435 = vsel %vm79, %v305, 0.0
  %436 = vadd.xlane.f32.xlu0 %v435
  %v437 = vpop.xlane.xlu0 %436
  %v438 = vsel %vm79, %v306, 0.0
  %439 = vadd.xlane.f32.xlu0 %v438
  %v440 = vpop.xlane.xlu0 %439
  %v441 = vsel %vm79, %v307, 0.0
  %442 = vadd.xlane.f32.xlu0 %v441
  %v443 = vpop.xlane.xlu0 %442
  %v444 = vsel %vm79, %v308, 0.0
  %445 = vadd.xlane.f32.xlu0 %v444
  %v446 = vpop.xlane.xlu0 %445
  %v447 = vsel %vm79, %v309, 0.0
  %448 = vadd.xlane.f32.xlu0 %v447
  %v449 = vpop.xlane.xlu0 %448
  %v450 = vsel %vm79, %v310, 0.0
  %451 = vadd.xlane.f32.xlu0 %v450
  %v452 = vpop.xlane.xlu0 %451
  %v453 = vsel %vm79, %v311, 0.0
  %454 = vadd.xlane.f32.xlu0 %v453
  %v455 = vpop.xlane.xlu0 %454
  %v456 = vsel %vm79, %v312, 0.0
  %457 = vadd.xlane.f32.xlu0 %v456
  %v458 = vpop.xlane.xlu0 %457
  %v459 = vsel %vm79, %v313, 0.0
  %460 = vadd.xlane.f32.xlu0 %v459
  %v461 = vpop.xlane.xlu0 %460
  %v462 = vsel %vm79, %v314, 0.0
  %463 = vadd.xlane.f32.xlu0 %v462
  %v464 = vpop.xlane.xlu0 %463
  %v465 = vsel %vm79, %v315, 0.0
  %466 = vadd.xlane.f32.xlu0 %v465
  %v467 = vpop.xlane.xlu0 %466
  %v468 = vsel %vm79, %v316, 0.0
  %469 = vadd.xlane.f32.xlu0 %v468
  %v470 = vpop.xlane.xlu0 %469
  %v471 = vsel %vm79, %v317, 0.0
  %472 = vadd.xlane.f32.xlu0 %v471
  %v473 = vpop.xlane.xlu0 %472
  %v474 = vsel %vm79, %v318, 0.0
  %475 = vadd.xlane.f32.xlu0 %v474
  %v476 = vpop.xlane.xlu0 %475
  %v477 = vsel %vm79, %v319, 0.0
  %478 = vadd.xlane.f32.xlu0 %v477
  %v479 = vpop.xlane.xlu0 %478
  %v480 = vsel %vm79, %v320, 0.0
  %481 = vadd.xlane.f32.xlu0 %v480
  %v482 = vpop.xlane.xlu0 %481
  %v483 = vsel %vm79, %v321, 0.0
  %484 = vadd.xlane.f32.xlu0 %v483
  %v485 = vpop.xlane.xlu0 %484
  %v486 = vsel %vm79, %v322, 0.0
  %487 = vadd.xlane.f32.xlu0 %v486
  %v488 = vpop.xlane.xlu0 %487
  %v489 = vsel %vm79, %v323, 0.0
  %490 = vadd.xlane.f32.xlu0 %v489
  %v491 = vpop.xlane.xlu0 %490
  %v492 = vsel %vm79, %v324, 0.0
  %493 = vadd.xlane.f32.xlu0 %v492
  %v494 = vpop.xlane.xlu0 %493
  %v495 = vsel %vm79, %v325, 0.0
  %496 = vadd.xlane.f32.xlu0 %v495
  %v497 = vpop.xlane.xlu0 %496
  %v498 = vsel %vm79, %v326, 0.0
  %499 = vadd.xlane.f32.xlu0 %v498
  %v500 = vpop.xlane.xlu0 %499
  %v501 = vsel %vm79, %v327, 0.0
  %502 = vadd.xlane.f32.xlu0 %v501
  %v503 = vpop.xlane.xlu0 %502
  %v504 = vsel %vm79, %v328, 0.0
  %505 = vadd.xlane.f32.xlu0 %v504
  %v506 = vpop.xlane.xlu0 %505
  %v507 = vsel %vm79, %v329, 0.0
  %508 = vadd.xlane.f32.xlu0 %v507
  %v509 = vpop.xlane.xlu0 %508
  %v510 = vsel %vm79, %v330, 0.0
  %511 = vadd.xlane.f32.xlu0 %v510
  %v512 = vpop.xlane.xlu0 %511
  %v513 = vsel %vm79, %v331, 0.0
  %514 = vadd.xlane.f32.xlu0 %v513
  %v515 = vpop.xlane.xlu0 %514
  %v516 = vsel %vm79, %v332, 0.0
  %517 = vadd.xlane.f32.xlu0 %v516
  %v518 = vpop.xlane.xlu0 %517
  %v519 = vsel %vm79, %v333, 0.0
  %520 = vadd.xlane.f32.xlu0 %v519
  %v521 = vpop.xlane.xlu0 %520
  %v522 = vsel %vm79, %v334, 0.0
  %523 = vadd.xlane.f32.xlu0 %v522
  %v524 = vpop.xlane.xlu0 %523
  %v525 = vsel %vm79, %v335, 0.0
  %526 = vadd.xlane.f32.xlu0 %v525
  %v527 = vpop.xlane.xlu0 %526
  %v528 = vmul.f32 %v82, 0.035714287
  %v529 = vmul.f32 %v85, 0.035714287
  %v530 = vmul.f32 %v88, 0.035714287
  %v531 = vmul.f32 %v91, 0.035714287
  %v532 = vmul.f32 %v94, 0.035714287
  %v533 = vmul.f32 %v97, 0.035714287
  %v534 = vmul.f32 %v100, 0.035714287
  %v535 = vmul.f32 %v103, 0.035714287
  %v536 = vmul.f32 %v106, 0.035714287
  %v537 = vmul.f32 %v109, 0.035714287
  %v538 = vmul.f32 %v112, 0.035714287
  %v539 = vmul.f32 %v115, 0.035714287
  %v540 = vmul.f32 %v118, 0.035714287
  %v541 = vmul.f32 %v121, 0.035714287
  %v542 = vmul.f32 %v124, 0.035714287
  %v543 = vmul.f32 %v127, 0.035714287
  %v544 = vmul.f32 %v130, 0.035714287
  %v545 = vmul.f32 %v133, 0.035714287
  %v546 = vmul.f32 %v136, 0.035714287
  %v547 = vmul.f32 %v139, 0.035714287
  %v548 = vmul.f32 %v142, 0.035714287
  %v549 = vmul.f32 %v145, 0.035714287
  %v550 = vmul.f32 %v148, 0.035714287
  %v551 = vmul.f32 %v151, 0.035714287
  %v552 = vmul.f32 %v154, 0.035714287
  %v553 = vmul.f32 %v157, 0.035714287
  %v554 = vmul.f32 %v160, 0.035714287
  %v555 = vmul.f32 %v163, 0.035714287
  %v556 = vmul.f32 %v166, 0.035714287
  %v557 = vmul.f32 %v169, 0.035714287
  %v558 = vmul.f32 %v172, 0.035714287
  %v559 = vmul.f32 %v175, 0.035714287
  %v560 = vmul.f32 %v178, 0.035714287
  %v561 = vmul.f32 %v181, 0.035714287
  %v562 = vmul.f32 %v184, 0.035714287
  %v563 = vmul.f32 %v187, 0.035714287
  %v564 = vmul.f32 %v190, 0.035714287
  %v565 = vmul.f32 %v193, 0.035714287
  %v566 = vmul.f32 %v196, 0.035714287
  %v567 = vmul.f32 %v199, 0.035714287
  %v568 = vmul.f32 %v202, 0.035714287
  %v569 = vmul.f32 %v205, 0.035714287
  %v570 = vmul.f32 %v208, 0.035714287
  %v571 = vmul.f32 %v211, 0.035714287
  %v572 = vmul.f32 %v214, 0.035714287
  %v573 = vmul.f32 %v217, 0.035714287
  %v574 = vmul.f32 %v220, 0.035714287
  %v575 = vmul.f32 %v223, 0.035714287
  %v576 = vmul.f32 %v226, 0.035714287
  %v577 = vmul.f32 %v229, 0.035714287
  %v578 = vmul.f32 %v232, 0.035714287
  %v579 = vmul.f32 %v235, 0.035714287
  %v580 = vmul.f32 %v238, 0.035714287
  %v581 = vmul.f32 %v241, 0.035714287
  %v582 = vmul.f32 %v244, 0.035714287
  %v583 = vmul.f32 %v247, 0.035714287
  %v584 = vmul.f32 %v250, 0.035714287
  %v585 = vmul.f32 %v253, 0.035714287
  %v586 = vmul.f32 %v256, 0.035714287
  %v587 = vmul.f32 %v259, 0.035714287
  %v588 = vmul.f32 %v262, 0.035714287
  %v589 = vmul.f32 %v265, 0.035714287
  %v590 = vmul.f32 %v268, 0.035714287
  %v591 = vmul.f32 %v271, 0.035714287
  %v592 = vmul.f32 %v338, 0.035714287
  %v593 = vmul.f32 %v341, 0.035714287
  %v594 = vmul.f32 %v344, 0.035714287
  %v595 = vmul.f32 %v347, 0.035714287
  %v596 = vmul.f32 %v350, 0.035714287
  %v597 = vmul.f32 %v353, 0.035714287
  %v598 = vmul.f32 %v356, 0.035714287
  %v599 = vmul.f32 %v359, 0.035714287
  %v600 = vmul.f32 %v362, 0.035714287
  %v601 = vmul.f32 %v365, 0.035714287
  %v602 = vmul.f32 %v368, 0.035714287
  %v603 = vmul.f32 %v371, 0.035714287
  %v604 = vmul.f32 %v374, 0.035714287
  %v605 = vmul.f32 %v377, 0.035714287
  %v606 = vmul.f32 %v380, 0.035714287
  %v607 = vmul.f32 %v383, 0.035714287
  %v608 = vmul.f32 %v386, 0.035714287
  %v609 = vmul.f32 %v389, 0.035714287
  %v610 = vmul.f32 %v392, 0.035714287
  %v611 = vmul.f32 %v395, 0.035714287
  %v612 = vmul.f32 %v398, 0.035714287
  %v613 = vmul.f32 %v401, 0.035714287
  %v614 = vmul.f32 %v404, 0.035714287
  %v615 = vmul.f32 %v407, 0.035714287
  %v616 = vmul.f32 %v410, 0.035714287
  %v617 = vmul.f32 %v413, 0.035714287
  %v618 = vmul.f32 %v416, 0.035714287
  %v619 = vmul.f32 %v419, 0.035714287
  %v620 = vmul.f32 %v422, 0.035714287
  %v621 = vmul.f32 %v425, 0.035714287
  %v622 = vmul.f32 %v428, 0.035714287
  %v623 = vmul.f32 %v431, 0.035714287
  %v624 = vmul.f32 %v434, 0.035714287
  %v625 = vmul.f32 %v437, 0.035714287
  %v626 = vmul.f32 %v440, 0.035714287
  %v627 = vmul.f32 %v443, 0.035714287
  %v628 = vmul.f32 %v446, 0.035714287
  %v629 = vmul.f32 %v449, 0.035714287
  %v630 = vmul.f32 %v452, 0.035714287
  %v631 = vmul.f32 %v455, 0.035714287
  %v632 = vmul.f32 %v458, 0.035714287
  %v633 = vmul.f32 %v461, 0.035714287
  %v634 = vmul.f32 %v464, 0.035714287
  %v635 = vmul.f32 %v467, 0.035714287
  %v636 = vmul.f32 %v470, 0.035714287
  %v637 = vmul.f32 %v473, 0.035714287
  %v638 = vmul.f32 %v476, 0.035714287
  %v639 = vmul.f32 %v479, 0.035714287
  %v640 = vmul.f32 %v482, 0.035714287
  %v641 = vmul.f32 %v485, 0.035714287
  %v642 = vmul.f32 %v488, 0.035714287
  %v643 = vmul.f32 %v491, 0.035714287
  %v644 = vmul.f32 %v494, 0.035714287
  %v645 = vmul.f32 %v497, 0.035714287
  %v646 = vmul.f32 %v500, 0.035714287
  %v647 = vmul.f32 %v503, 0.035714287
  %v648 = vmul.f32 %v506, 0.035714287
  %v649 = vmul.f32 %v509, 0.035714287
  %v650 = vmul.f32 %v512, 0.035714287
  %v651 = vmul.f32 %v515, 0.035714287
  %v652 = vmul.f32 %v518, 0.035714287
  %v653 = vmul.f32 %v521, 0.035714287
  %v654 = vmul.f32 %v524, 0.035714287
  %v655 = vmul.f32 %v527, 0.035714287
  %v656 = vmul.f32 %v528, %v528
  %v657 = vmul.f32 %v529, %v529
  %v658 = vmul.f32 %v530, %v530
  %v659 = vmul.f32 %v531, %v531
  %v660 = vmul.f32 %v532, %v532
  %v661 = vmul.f32 %v533, %v533
  %v662 = vmul.f32 %v534, %v534
  %v663 = vmul.f32 %v535, %v535
  %v664 = vmul.f32 %v536, %v536
  %v665 = vmul.f32 %v537, %v537
  %v666 = vmul.f32 %v538, %v538
  %v667 = vmul.f32 %v539, %v539
  %v668 = vmul.f32 %v540, %v540
  %v669 = vmul.f32 %v541, %v541
  %v670 = vmul.f32 %v542, %v542
  %v671 = vmul.f32 %v543, %v543
  %v672 = vmul.f32 %v544, %v544
  %v673 = vmul.f32 %v545, %v545
  %v674 = vmul.f32 %v546, %v546
  %v675 = vmul.f32 %v547, %v547
  %v676 = vmul.f32 %v548, %v548
  %v677 = vmul.f32 %v549, %v549
  %v678 = vmul.f32 %v550, %v550
  %v679 = vmul.f32 %v551, %v551
  %v680 = vmul.f32 %v552, %v552
  %v681 = vmul.f32 %v553, %v553
  %v682 = vmul.f32 %v554, %v554
  %v683 = vmul.f32 %v555, %v555
  %v684 = vmul.f32 %v556, %v556
  %v685 = vmul.f32 %v557, %v557
  %v686 = vmul.f32 %v558, %v558
  %v687 = vmul.f32 %v559, %v559
  %v688 = vmul.f32 %v560, %v560
  %v689 = vmul.f32 %v561, %v561
  %v690 = vmul.f32 %v562, %v562
  %v691 = vmul.f32 %v563, %v563
  %v692 = vmul.f32 %v564, %v564
  %v693 = vmul.f32 %v565, %v565
  %v694 = vmul.f32 %v566, %v566
  %v695 = vmul.f32 %v567, %v567
  %v696 = vmul.f32 %v568, %v568
  %v697 = vmul.f32 %v569, %v569
  %v698 = vmul.f32 %v570, %v570
  %v699 = vmul.f32 %v571, %v571
  %v700 = vmul.f32 %v572, %v572
  %v701 = vmul.f32 %v573, %v573
  %v702 = vmul.f32 %v574, %v574
  %v703 = vmul.f32 %v575, %v575
  %v704 = vmul.f32 %v576, %v576
  %v705 = vmul.f32 %v577, %v577
  %v706 = vmul.f32 %v578, %v578
  %v707 = vmul.f32 %v579, %v579
  %v708 = vmul.f32 %v580, %v580
  %v709 = vmul.f32 %v581, %v581
  %v710 = vmul.f32 %v582, %v582
  %v711 = vmul.f32 %v583, %v583
  %v712 = vmul.f32 %v584, %v584
  %v713 = vmul.f32 %v585, %v585
  %v714 = vmul.f32 %v586, %v586
  %v715 = vmul.f32 %v587, %v587
  %v716 = vmul.f32 %v588, %v588
  %v717 = vmul.f32 %v589, %v589
  %v718 = vmul.f32 %v590, %v590
  %v719 = vmul.f32 %v591, %v591
  %v720 = vsub.f32 %v592, %v656
  %v721 = vsub.f32 %v593, %v657
  %v722 = vsub.f32 %v594, %v658
  %v723 = vsub.f32 %v595, %v659
  %v724 = vsub.f32 %v596, %v660
  %v725 = vsub.f32 %v597, %v661
  %v726 = vsub.f32 %v598, %v662
  %v727 = vsub.f32 %v599, %v663
  %v728 = vsub.f32 %v600, %v664
  %v729 = vsub.f32 %v601, %v665
  %v730 = vsub.f32 %v602, %v666
  %v731 = vsub.f32 %v603, %v667
  %v732 = vsub.f32 %v604, %v668
  %v733 = vsub.f32 %v605, %v669
  %v734 = vsub.f32 %v606, %v670
  %v735 = vsub.f32 %v607, %v671
  %v736 = vsub.f32 %v608, %v672
  %v737 = vsub.f32 %v609, %v673
  %v738 = vsub.f32 %v610, %v674
  %v739 = vsub.f32 %v611, %v675
  %v740 = vsub.f32 %v612, %v676
  %v741 = vsub.f32 %v613, %v677
  %v742 = vsub.f32 %v614, %v678
  %v743 = vsub.f32 %v615, %v679
  %v744 = vsub.f32 %v616, %v680
  %v745 = vsub.f32 %v617, %v681
  %v746 = vsub.f32 %v618, %v682
  %v747 = vsub.f32 %v619, %v683
  %v748 = vsub.f32 %v620, %v684
  %v749 = vsub.f32 %v621, %v685
  %v750 = vsub.f32 %v622, %v686
  %v751 = vsub.f32 %v623, %v687
  %v752 = vsub.f32 %v624, %v688
  %v753 = vsub.f32 %v625, %v689
  %v754 = vsub.f32 %v626, %v690
  %v755 = vsub.f32 %v627, %v691
  %v756 = vsub.f32 %v628, %v692
  %v757 = vsub.f32 %v629, %v693
  %v758 = vsub.f32 %v630, %v694
  %v759 = vsub.f32 %v631, %v695
  %v760 = vsub.f32 %v632, %v696
  %v761 = vsub.f32 %v633, %v697
  %v762 = vsub.f32 %v634, %v698
  %v763 = vsub.f32 %v635, %v699
  %v764 = vsub.f32 %v636, %v700
  %v765 = vsub.f32 %v637, %v701
  %v766 = vsub.f32 %v638, %v702
  %v767 = vsub.f32 %v639, %v703
  %v768 = vsub.f32 %v640, %v704
  %v769 = vsub.f32 %v641, %v705
  %v770 = vsub.f32 %v642, %v706
  %v771 = vsub.f32 %v643, %v707
  %v772 = vsub.f32 %v644, %v708
  %v773 = vsub.f32 %v645, %v709
  %v774 = vsub.f32 %v646, %v710
  %v775 = vsub.f32 %v647, %v711
  %v776 = vsub.f32 %v648, %v712
  %v777 = vsub.f32 %v649, %v713
  %v778 = vsub.f32 %v650, %v714
  %v779 = vsub.f32 %v651, %v715
  %v780 = vsub.f32 %v652, %v716
  %v781 = vsub.f32 %v653, %v717
  %v782 = vsub.f32 %v654, %v718
  %v783 = vsub.f32 %v655, %v719
  %v784 = vmax.f32 %v720, 0.0
  %v785 = vmax.f32 %v721, 0.0
  %v786 = vmax.f32 %v722, 0.0
  %v787 = vmax.f32 %v723, 0.0
  %v788 = vmax.f32 %v724, 0.0
  %v789 = vmax.f32 %v725, 0.0
  %v790 = vmax.f32 %v726, 0.0
  %v791 = vmax.f32 %v727, 0.0
  %v792 = vmax.f32 %v728, 0.0
  %v793 = vmax.f32 %v729, 0.0
  %v794 = vmax.f32 %v730, 0.0
  %v795 = vmax.f32 %v731, 0.0
  %v796 = vmax.f32 %v732, 0.0
  %v797 = vmax.f32 %v733, 0.0
  %v798 = vmax.f32 %v734, 0.0
  %v799 = vmax.f32 %v735, 0.0
  %v800 = vmax.f32 %v736, 0.0
  %v801 = vmax.f32 %v737, 0.0
  %v802 = vmax.f32 %v738, 0.0
  %v803 = vmax.f32 %v739, 0.0
  %v804 = vmax.f32 %v740, 0.0
  %v805 = vmax.f32 %v741, 0.0
  %v806 = vmax.f32 %v742, 0.0
  %v807 = vmax.f32 %v743, 0.0
  %v808 = vmax.f32 %v744, 0.0
  %v809 = vmax.f32 %v745, 0.0
  %v810 = vmax.f32 %v746, 0.0
  %v811 = vmax.f32 %v747, 0.0
  %v812 = vmax.f32 %v748, 0.0
  %v813 = vmax.f32 %v749, 0.0
  %v814 = vmax.f32 %v750, 0.0
  %v815 = vmax.f32 %v751, 0.0
  %v816 = vmax.f32 %v752, 0.0
  %v817 = vmax.f32 %v753, 0.0
  %v818 = vmax.f32 %v754, 0.0
  %v819 = vmax.f32 %v755, 0.0
  %v820 = vmax.f32 %v756, 0.0
  %v821 = vmax.f32 %v757, 0.0
  %v822 = vmax.f32 %v758, 0.0
  %v823 = vmax.f32 %v759, 0.0
  %v824 = vmax.f32 %v760, 0.0
  %v825 = vmax.f32 %v761, 0.0
  %v826 = vmax.f32 %v762, 0.0
  %v827 = vmax.f32 %v763, 0.0
  %v828 = vmax.f32 %v764, 0.0
  %v829 = vmax.f32 %v765, 0.0
  %v830 = vmax.f32 %v766, 0.0
  %v831 = vmax.f32 %v767, 0.0
  %v832 = vmax.f32 %v768, 0.0
  %v833 = vmax.f32 %v769, 0.0
  %v834 = vmax.f32 %v770, 0.0
  %v835 = vmax.f32 %v771, 0.0
  %v836 = vmax.f32 %v772, 0.0
  %v837 = vmax.f32 %v773, 0.0
  %v838 = vmax.f32 %v774, 0.0
  %v839 = vmax.f32 %v775, 0.0
  %v840 = vmax.f32 %v776, 0.0
  %v841 = vmax.f32 %v777, 0.0
  %v842 = vmax.f32 %v778, 0.0
  %v843 = vmax.f32 %v779, 0.0
  %v844 = vmax.f32 %v780, 0.0
  %v845 = vmax.f32 %v781, 0.0
  %v846 = vmax.f32 %v782, 0.0
  %v847 = vmax.f32 %v783, 0.0
  %v848 = vadd.f32 %v784, 1e-05
  %v849 = vadd.f32 %v785, 1e-05
  %v850 = vadd.f32 %v786, 1e-05
  %v851 = vadd.f32 %v787, 1e-05
  %v852 = vadd.f32 %v788, 1e-05
  %v853 = vadd.f32 %v789, 1e-05
  %v854 = vadd.f32 %v790, 1e-05
  %v855 = vadd.f32 %v791, 1e-05
  %v856 = vadd.f32 %v792, 1e-05
  %v857 = vadd.f32 %v793, 1e-05
  %v858 = vadd.f32 %v794, 1e-05
  %v859 = vadd.f32 %v795, 1e-05
  %v860 = vadd.f32 %v796, 1e-05
  %v861 = vadd.f32 %v797, 1e-05
  %v862 = vadd.f32 %v798, 1e-05
  %v863 = vadd.f32 %v799, 1e-05
  %v864 = vadd.f32 %v800, 1e-05
  %v865 = vadd.f32 %v801, 1e-05
  %v866 = vadd.f32 %v802, 1e-05
  %v867 = vadd.f32 %v803, 1e-05
  %v868 = vadd.f32 %v804, 1e-05
  %v869 = vadd.f32 %v805, 1e-05
  %v870 = vadd.f32 %v806, 1e-05
  %v871 = vadd.f32 %v807, 1e-05
  %v872 = vadd.f32 %v808, 1e-05
  %v873 = vadd.f32 %v809, 1e-05
  %v874 = vadd.f32 %v810, 1e-05
  %v875 = vadd.f32 %v811, 1e-05
  %v876 = vadd.f32 %v812, 1e-05
  %v877 = vadd.f32 %v813, 1e-05
  %v878 = vadd.f32 %v814, 1e-05
  %v879 = vadd.f32 %v815, 1e-05
  %v880 = vadd.f32 %v816, 1e-05
  %v881 = vadd.f32 %v817, 1e-05
  %v882 = vadd.f32 %v818, 1e-05
  %v883 = vadd.f32 %v819, 1e-05
  %v884 = vadd.f32 %v820, 1e-05
  %v885 = vadd.f32 %v821, 1e-05
  %v886 = vadd.f32 %v822, 1e-05
  %v887 = vadd.f32 %v823, 1e-05
  %v888 = vadd.f32 %v824, 1e-05
  %v889 = vadd.f32 %v825, 1e-05
  %v890 = vadd.f32 %v826, 1e-05
  %v891 = vadd.f32 %v827, 1e-05
  %v892 = vadd.f32 %v828, 1e-05
  %v893 = vadd.f32 %v829, 1e-05
  %v894 = vadd.f32 %v830, 1e-05
  %v895 = vadd.f32 %v831, 1e-05
  %v896 = vadd.f32 %v832, 1e-05
  %v897 = vadd.f32 %v833, 1e-05
  %v898 = vadd.f32 %v834, 1e-05
  %v899 = vadd.f32 %v835, 1e-05
  %v900 = vadd.f32 %v836, 1e-05
  %v901 = vadd.f32 %v837, 1e-05
  %v902 = vadd.f32 %v838, 1e-05
  %v903 = vadd.f32 %v839, 1e-05
  %v904 = vadd.f32 %v840, 1e-05
  %v905 = vadd.f32 %v841, 1e-05
  %v906 = vadd.f32 %v842, 1e-05
  %v907 = vadd.f32 %v843, 1e-05
  %v908 = vadd.f32 %v844, 1e-05
  %v909 = vadd.f32 %v845, 1e-05
  %v910 = vadd.f32 %v846, 1e-05
  %v911 = vadd.f32 %v847, 1e-05
  %v912 = vrsqrt.pop %v848
  %v913 = vrsqrt.pop %v849
  %v914 = vrsqrt.pop %v850
  %v915 = vrsqrt.pop %v851
  %v916 = vrsqrt.pop %v852
  %v917 = vrsqrt.pop %v853
  %v918 = vrsqrt.pop %v854
  %v919 = vrsqrt.pop %v855
  %v920 = vrsqrt.pop %v856
  %v921 = vrsqrt.pop %v857
  %v922 = vrsqrt.pop %v858
  %v923 = vrsqrt.pop %v859
  %v924 = vrsqrt.pop %v860
  %v925 = vrsqrt.pop %v861
  %v926 = vrsqrt.pop %v862
  %v927 = vrsqrt.pop %v863
  %v928 = vrsqrt.pop %v864
  %v929 = vrsqrt.pop %v865
  %v930 = vrsqrt.pop %v866
  %v931 = vrsqrt.pop %v867
  %v932 = vrsqrt.pop %v868
  %v933 = vrsqrt.pop %v869
  %v934 = vrsqrt.pop %v870
  %v935 = vrsqrt.pop %v871
  %v936 = vrsqrt.pop %v872
  %v937 = vrsqrt.pop %v873
  %v938 = vrsqrt.pop %v874
  %v939 = vrsqrt.pop %v875
  %v940 = vrsqrt.pop %v876
  %v941 = vrsqrt.pop %v877
  %v942 = vrsqrt.pop %v878
  %v943 = vrsqrt.pop %v879
  %v944 = vrsqrt.pop %v880
  %v945 = vrsqrt.pop %v881
  %v946 = vrsqrt.pop %v882
  %v947 = vrsqrt.pop %v883
  %v948 = vrsqrt.pop %v884
  %v949 = vrsqrt.pop %v885
  %v950 = vrsqrt.pop %v886
  %v951 = vrsqrt.pop %v887
  %v952 = vrsqrt.pop %v888
  %v953 = vrsqrt.pop %v889
  %v954 = vrsqrt.pop %v890
  %v955 = vrsqrt.pop %v891
  %v956 = vrsqrt.pop %v892
  %v957 = vrsqrt.pop %v893
  %v958 = vrsqrt.pop %v894
  %v959 = vrsqrt.pop %v895
  %v960 = vrsqrt.pop %v896
  %v961 = vrsqrt.pop %v897
  %v962 = vrsqrt.pop %v898
  %v963 = vrsqrt.pop %v899
  %v964 = vrsqrt.pop %v900
  %v965 = vrsqrt.pop %v901
  %v966 = vrsqrt.pop %v902
  %v967 = vrsqrt.pop %v903
  %v968 = vrsqrt.pop %v904
  %v969 = vrsqrt.pop %v905
  %v970 = vrsqrt.pop %v906
  %v971 = vrsqrt.pop %v907
  %v972 = vrsqrt.pop %v908
  %v973 = vrsqrt.pop %v909
  %v974 = vrsqrt.pop %v910
  %v975 = vrsqrt.pop %v911
  %v976 = vsub.f32 %v15, %v528
  %v977 = vsub.f32 %v16, %v529
  %v978 = vsub.f32 %v17, %v530
  %v979 = vsub.f32 %v18, %v531
  %v980 = vsub.f32 %v19, %v532
  %v981 = vsub.f32 %v20, %v533
  %v982 = vsub.f32 %v21, %v534
  %v983 = vsub.f32 %v22, %v535
  %v984 = vsub.f32 %v23, %v536
  %v985 = vsub.f32 %v24, %v537
  %v986 = vsub.f32 %v25, %v538
  %v987 = vsub.f32 %v26, %v539
  %v988 = vsub.f32 %v27, %v540
  %v989 = vsub.f32 %v28, %v541
  %v990 = vsub.f32 %v29, %v542
  %v991 = vsub.f32 %v30, %v543
  %v992 = vsub.f32 %v31, %v544
  %v993 = vsub.f32 %v32, %v545
  %v994 = vsub.f32 %v33, %v546
  %v995 = vsub.f32 %v34, %v547
  %v996 = vsub.f32 %v35, %v548
  %v997 = vsub.f32 %v36, %v549
  %v998 = vsub.f32 %v37, %v550
  %v999 = vsub.f32 %v38, %v551
  %v1000 = vsub.f32 %v39, %v552
  %v1001 = vsub.f32 %v40, %v553
  %v1002 = vsub.f32 %v41, %v554
  %v1003 = vsub.f32 %v42, %v555
  %v1004 = vsub.f32 %v43, %v556
  %v1005 = vsub.f32 %v44, %v557
  %v1006 = vsub.f32 %v45, %v558
  %v1007 = vsub.f32 %v46, %v559
  %v1008 = vsub.f32 %v47, %v560
  %v1009 = vsub.f32 %v48, %v561
  %v1010 = vsub.f32 %v49, %v562
  %v1011 = vsub.f32 %v50, %v563
  %v1012 = vsub.f32 %v51, %v564
  %v1013 = vsub.f32 %v52, %v565
  %v1014 = vsub.f32 %v53, %v566
  %v1015 = vsub.f32 %v54, %v567
  %v1016 = vsub.f32 %v55, %v568
  %v1017 = vsub.f32 %v56, %v569
  %v1018 = vsub.f32 %v57, %v570
  %v1019 = vsub.f32 %v58, %v571
  %v1020 = vsub.f32 %v59, %v572
  %v1021 = vsub.f32 %v60, %v573
  %v1022 = vsub.f32 %v61, %v574
  %v1023 = vsub.f32 %v62, %v575
  %v1024 = vsub.f32 %v63, %v576
  %v1025 = vsub.f32 %v64, %v577
  %v1026 = vsub.f32 %v65, %v578
  %v1027 = vsub.f32 %v66, %v579
  %v1028 = vsub.f32 %v67, %v580
  %v1029 = vsub.f32 %v68, %v581
  %v1030 = vsub.f32 %v69, %v582
  %v1031 = vsub.f32 %v70, %v583
  %v1032 = vsub.f32 %v71, %v584
  %v1033 = vsub.f32 %v72, %v585
  %v1034 = vsub.f32 %v73, %v586
  %v1035 = vsub.f32 %v74, %v587
  %v1036 = vsub.f32 %v75, %v588
  %v1037 = vsub.f32 %v76, %v589
  %v1038 = vsub.f32 %v77, %v590
  %v1039 = vsub.f32 %v78, %v591
  %v1040 = vmul.f32 %v976, %v912
  %v1041 = vmul.f32 %v977, %v913
  %v1042 = vmul.f32 %v978, %v914
  %v1043 = vmul.f32 %v979, %v915
  %v1044 = vmul.f32 %v980, %v916
  %v1045 = vmul.f32 %v981, %v917
  %v1046 = vmul.f32 %v982, %v918
  %v1047 = vmul.f32 %v983, %v919
  %v1048 = vmul.f32 %v984, %v920
  %v1049 = vmul.f32 %v985, %v921
  %v1050 = vmul.f32 %v986, %v922
  %v1051 = vmul.f32 %v987, %v923
  %v1052 = vmul.f32 %v988, %v924
  %v1053 = vmul.f32 %v989, %v925
  %v1054 = vmul.f32 %v990, %v926
  %v1055 = vmul.f32 %v991, %v927
  %v1056 = vmul.f32 %v992, %v928
  %v1057 = vmul.f32 %v993, %v929
  %v1058 = vmul.f32 %v994, %v930
  %v1059 = vmul.f32 %v995, %v931
  %v1060 = vmul.f32 %v996, %v932
  %v1061 = vmul.f32 %v997, %v933
  %v1062 = vmul.f32 %v998, %v934
  %v1063 = vmul.f32 %v999, %v935
  %v1064 = vmul.f32 %v1000, %v936
  %v1065 = vmul.f32 %v1001, %v937
  %v1066 = vmul.f32 %v1002, %v938
  %v1067 = vmul.f32 %v1003, %v939
  %v1068 = vmul.f32 %v1004, %v940
  %v1069 = vmul.f32 %v1005, %v941
  %v1070 = vmul.f32 %v1006, %v942
  %v1071 = vmul.f32 %v1007, %v943
  %v1072 = vmul.f32 %v1008, %v944
  %v1073 = vmul.f32 %v1009, %v945
  %v1074 = vmul.f32 %v1010, %v946
  %v1075 = vmul.f32 %v1011, %v947
  %v1076 = vmul.f32 %v1012, %v948
  %v1077 = vmul.f32 %v1013, %v949
  %v1078 = vmul.f32 %v1014, %v950
  %v1079 = vmul.f32 %v1015, %v951
  %v1080 = vmul.f32 %v1016, %v952
  %v1081 = vmul.f32 %v1017, %v953
  %v1082 = vmul.f32 %v1018, %v954
  %v1083 = vmul.f32 %v1019, %v955
  %v1084 = vmul.f32 %v1020, %v956
  %v1085 = vmul.f32 %v1021, %v957
  %v1086 = vmul.f32 %v1022, %v958
  %v1087 = vmul.f32 %v1023, %v959
  %v1088 = vmul.f32 %v1024, %v960
  %v1089 = vmul.f32 %v1025, %v961
  %v1090 = vmul.f32 %v1026, %v962
  %v1091 = vmul.f32 %v1027, %v963
  %v1092 = vmul.f32 %v1028, %v964
  %v1093 = vmul.f32 %v1029, %v965
  %v1094 = vmul.f32 %v1030, %v966
  %v1095 = vmul.f32 %v1031, %v967
  %v1096 = vmul.f32 %v1032, %v968
  %v1097 = vmul.f32 %v1033, %v969
  %v1098 = vmul.f32 %v1034, %v970
  %v1099 = vmul.f32 %v1035, %v971
  %v1100 = vmul.f32 %v1036, %v972
  %v1101 = vmul.f32 %v1037, %v973
  %v1102 = vmul.f32 %v1038, %v974
  %v1103 = vmul.f32 %v1039, %v975
  %v1104 = vpack.c.bf16 %v1041, %v1040
  %v1105 = vpack.c.bf16 %v1043, %v1042
  %v1106 = vpack.c.bf16 %v1045, %v1044
  %v1107 = vpack.c.bf16 %v1047, %v1046
  %v1108 = vpack.c.bf16 %v1049, %v1048
  %v1109 = vpack.c.bf16 %v1051, %v1050
  %v1110 = vpack.c.bf16 %v1053, %v1052
  %v1111 = vpack.c.bf16 %v1055, %v1054
  %v1112 = vpack.c.bf16 %v1057, %v1056
  %v1113 = vpack.c.bf16 %v1059, %v1058
  %v1114 = vpack.c.bf16 %v1061, %v1060
  %v1115 = vpack.c.bf16 %v1063, %v1062
  %v1116 = vpack.c.bf16 %v1065, %v1064
  %v1117 = vpack.c.bf16 %v1067, %v1066
  %v1118 = vpack.c.bf16 %v1069, %v1068
  %v1119 = vpack.c.bf16 %v1071, %v1070
  %v1120 = vpack.c.bf16 %v1073, %v1072
  %v1121 = vpack.c.bf16 %v1075, %v1074
  %v1122 = vpack.c.bf16 %v1077, %v1076
  %v1123 = vpack.c.bf16 %v1079, %v1078
  %v1124 = vpack.c.bf16 %v1081, %v1080
  %v1125 = vpack.c.bf16 %v1083, %v1082
  %v1126 = vpack.c.bf16 %v1085, %v1084
  %v1127 = vpack.c.bf16 %v1087, %v1086
  %v1128 = vpack.c.bf16 %v1089, %v1088
  %v1129 = vpack.c.bf16 %v1091, %v1090
  %v1130 = vpack.c.bf16 %v1093, %v1092
  %v1131 = vpack.c.bf16 %v1095, %v1094
  %v1132 = vpack.c.bf16 %v1097, %v1096
  %v1133 = vpack.c.bf16 %v1099, %v1098
  %v1134 = vpack.c.bf16 %v1101, %v1100
  %v1135 = vpack.c.bf16 %v1103, %v1102
  %v1136 = vld [vmem:[%s1] sm:$0xf]
  %v1137 = vld [vmem:[%s1 + $0x4] sm:$0xf]
  %v1138 = vld [vmem:[%s1 + $0x8] sm:$0xf]
  %v1139 = vld [vmem:[%s1 + $0xc] sm:$0x3]
  %v1140 = vld [vmem:[%s2] sm:$0x1]
  %v1142 = vlaneseq
  %v1143 = vshrl.u32 %v1142, 7
  %v1144 = vsub.s32 0, %v1143
  %v1145 = vrot.slane %v1140, %v1144
  %v1151 = vunpack.c.l.b16 %v1136
  %v1152 = vunpack.c.l.b16 %v1137
  %v1153 = vunpack.c.l.b16 %v1138
  %v1154 = vunpack.c.l.b16 %v1139
  %v1155 = vpack.c.b16 %v1152, %v1151
  %v1156 = vpack.c.b16 %v1154, %v1153
  %v1159 = vsel %vm79, %v1104, 0
  %v1162 = vsel %vm79, %v1105, 0
  %v1165 = vsel %vm79, %v1106, 0
  %v1168 = vsel %vm79, %v1107, 0
  %v1171 = vsel %vm79, %v1108, 0
  %v1174 = vsel %vm79, %v1109, 0
  %v1177 = vsel %vm79, %v1110, 0
  %v1180 = vsel %vm79, %v1111, 0
  %v1183 = vsel %vm79, %v1112, 0
  %v1186 = vsel %vm79, %v1113, 0
  %v1189 = vsel %vm79, %v1114, 0
  %v1192 = vsel %vm79, %v1115, 0
  %v1195 = vsel %vm79, %v1116, 0
  %v1198 = vsel %vm79, %v1117, 0
  %v1201 = vsel %vm79, %v1118, 0
  %v1204 = vsel %vm79, %v1119, 0
  %v1207 = vsel %vm79, %v1120, 0
  %v1210 = vsel %vm79, %v1121, 0
  %v1213 = vsel %vm79, %v1122, 0
  %v1216 = vsel %vm79, %v1123, 0
  %v1219 = vsel %vm79, %v1124, 0
  %v1222 = vsel %vm79, %v1125, 0
  %v1225 = vsel %vm79, %v1126, 0
  %v1228 = vsel %vm79, %v1127, 0
  %v1231 = vsel %vm79, %v1128, 0
  %v1234 = vsel %vm79, %v1129, 0
  %v1237 = vsel %vm79, %v1130, 0
  %v1240 = vsel %vm79, %v1131, 0
  %v1243 = vsel %vm79, %v1132, 0
  %v1246 = vsel %vm79, %v1133, 0
  %v1249 = vsel %vm79, %v1134, 0
  %v1252 = vsel %vm79, %v1135, 0
  %vm1254 = vcmask 1045504
  %v1256 = vsel %vm1254, %v1156, 0
  %1258 = vmatprep.subr.bf16.mxu0 0
  %1259 = vmatpush1.bf16.msra.mxu0 %v1155
  %1260 = vmatprep.subr.bf16.mxu0 0
  %1261 = vmatpush1.bf16.msra.mxu0 %v1256
  %1262 = vmatprep.subr.bf16.mxu0 0
  %1263 = vmatpush1.bf16.msra.mxu0 0
  %1264 = vmatprep.subr.bf16.mxu0 0
  %1265 = vmatpush1.bf16.msra.mxu0 0
  %1266 = vmatprep.subr.bf16.mxu0 0
  %1267 = vmatpush1.bf16.msra.mxu0 0
  %1268 = vmatprep.subr.bf16.mxu0 0
  %1269 = vmatpush1.bf16.msra.mxu0 0
  %1270 = vmatprep.subr.bf16.mxu0 0
  %1271 = vmatpush1.bf16.msra.mxu0 0
  %1272 = vmatprep.subr.bf16.mxu0 0
  %1273 = vmatpush1.bf16.msra.mxu0 0
  %1274 = vmatprep.subr.bf16.mxu0 0
  %1275 = vmatpush1.bf16.msra.mxu0 0
  %1276 = vmatprep.subr.bf16.mxu0 0
  %1277 = vmatpush1.bf16.msra.mxu0 0
  %1278 = vmatprep.subr.bf16.mxu0 0
  %1279 = vmatpush1.bf16.msra.mxu0 0
  %1280 = vmatprep.subr.bf16.mxu0 0
  %1281 = vmatpush1.bf16.msra.mxu0 0
  %1282 = vmatprep.subr.bf16.mxu0 0
  %1283 = vmatpush1.bf16.msra.mxu0 0
  %1284 = vmatprep.subr.bf16.mxu0 0
  %1285 = vmatpush1.bf16.msra.mxu0 0
  %1286 = vmatprep.subr.bf16.mxu0 0
  %1287 = vmatpush1.bf16.msra.mxu0 0
  %1288 = vmatprep.subr.bf16.mxu0 0
  %1289 = vmatpush1.bf16.msra.mxu0 0
  %1290 = vmatprep.mubr.bf16.mxu0 0
  %1291 = vmatmul.mubr.bf16.gmra.mrb[0].mxu0 %v1159
  %v1292 = vpop.f32.mrb[0].mxu0
  %v1293 = vadd.f32 %v1145, %v1292
  %v1294 = vpop.f32.mrb[0].mxu0
  %v1295 = vpop.f32.mrb[0].mxu0
  %v1296 = vadd.f32 %v1145, %v1295
  %v1297 = vpop.f32.mrb[0].mxu0
  %1298 = vmatprep.mubr.bf16.mxu0 0
  %1299 = vmatmul.mubr.bf16.gmra.mrb[0].mxu0 %v1162
  %v1300 = vpop.f32.mrb[0].mxu0
  %v1301 = vadd.f32 %v1145, %v1300
  %v1302 = vpop.f32.mrb[0].mxu0
  %v1303 = vpop.f32.mrb[0].mxu0
  %v1304 = vadd.f32 %v1145, %v1303
  %v1305 = vpop.f32.mrb[0].mxu0
  %1306 = vmatprep.mubr.bf16.mxu0 0
  %1307 = vmatmul.mubr.bf16.gmra.mrb[0].mxu0 %v1165
  %v1308 = vpop.f32.mrb[0].mxu0
  %v1309 = vadd.f32 %v1145, %v1308
  %v1310 = vpop.f32.mrb[0].mxu0
  %v1311 = vpop.f32.mrb[0].mxu0
  %v1312 = vadd.f32 %v1145, %v1311
  %v1313 = vpop.f32.mrb[0].mxu0
  %1314 = vmatprep.mubr.bf16.mxu0 0
  %1315 = vmatmul.mubr.bf16.gmra.mrb[0].mxu0 %v1168
  %v1316 = vpop.f32.mrb[0].mxu0
  %v1317 = vadd.f32 %v1145, %v1316
  %v1318 = vpop.f32.mrb[0].mxu0
  %v1319 = vpop.f32.mrb[0].mxu0
  %v1320 = vadd.f32 %v1145, %v1319
  %v1321 = vpop.f32.mrb[0].mxu0
  %1322 = vmatprep.mubr.bf16.mxu0 0
  %1323 = vmatmul.mubr.bf16.gmra.mrb[0].mxu0 %v1171
  %v1324 = vpop.f32.mrb[0].mxu0
  %v1325 = vadd.f32 %v1145, %v1324
  %v1326 = vpop.f32.mrb[0].mxu0
  %v1327 = vpop.f32.mrb[0].mxu0
  %v1328 = vadd.f32 %v1145, %v1327
  %v1329 = vpop.f32.mrb[0].mxu0
  %1330 = vmatprep.mubr.bf16.mxu0 0
  %1331 = vmatmul.mubr.bf16.gmra.mrb[0].mxu0 %v1174
  %v1332 = vpop.f32.mrb[0].mxu0
  %v1333 = vadd.f32 %v1145, %v1332
  %v1334 = vpop.f32.mrb[0].mxu0
  %v1335 = vpop.f32.mrb[0].mxu0
  %v1336 = vadd.f32 %v1145, %v1335
  %v1337 = vpop.f32.mrb[0].mxu0
  %1338 = vmatprep.mubr.bf16.mxu0 0
  %1339 = vmatmul.mubr.bf16.gmra.mrb[0].mxu0 %v1177
  %v1340 = vpop.f32.mrb[0].mxu0
  %v1341 = vadd.f32 %v1145, %v1340
  %v1342 = vpop.f32.mrb[0].mxu0
  %v1343 = vpop.f32.mrb[0].mxu0
  %v1344 = vadd.f32 %v1145, %v1343
  %v1345 = vpop.f32.mrb[0].mxu0
  %1346 = vmatprep.mubr.bf16.mxu0 0
  %1347 = vmatmul.mubr.bf16.gmra.mrb[0].mxu0 %v1180
  %v1348 = vpop.f32.mrb[0].mxu0
  %v1349 = vadd.f32 %v1145, %v1348
  %v1350 = vpop.f32.mrb[0].mxu0
  %v1351 = vpop.f32.mrb[0].mxu0
  %v1352 = vadd.f32 %v1145, %v1351
  %v1353 = vpop.f32.mrb[0].mxu0
  %1354 = vmatprep.mubr.bf16.mxu0 0
  %1355 = vmatmul.mubr.bf16.gmra.mrb[0].mxu0 %v1183
  %v1356 = vpop.f32.mrb[0].mxu0
  %v1357 = vadd.f32 %v1145, %v1356
  %v1358 = vpop.f32.mrb[0].mxu0
  %v1359 = vpop.f32.mrb[0].mxu0
  %v1360 = vadd.f32 %v1145, %v1359
  %v1361 = vpop.f32.mrb[0].mxu0
  %1362 = vmatprep.mubr.bf16.mxu0 0
  %1363 = vmatmul.mubr.bf16.gmra.mrb[0].mxu0 %v1186
  %v1364 = vpop.f32.mrb[0].mxu0
  %v1365 = vadd.f32 %v1145, %v1364
  %v1366 = vpop.f32.mrb[0].mxu0
  %v1367 = vpop.f32.mrb[0].mxu0
  %v1368 = vadd.f32 %v1145, %v1367
  %v1369 = vpop.f32.mrb[0].mxu0
  %1370 = vmatprep.mubr.bf16.mxu0 0
  %1371 = vmatmul.mubr.bf16.gmra.mrb[0].mxu0 %v1189
  %v1372 = vpop.f32.mrb[0].mxu0
  %v1373 = vadd.f32 %v1145, %v1372
  %v1374 = vpop.f32.mrb[0].mxu0
  %v1375 = vpop.f32.mrb[0].mxu0
  %v1376 = vadd.f32 %v1145, %v1375
  %v1377 = vpop.f32.mrb[0].mxu0
  %1378 = vmatprep.mubr.bf16.mxu0 0
  %1379 = vmatmul.mubr.bf16.gmra.mrb[0].mxu0 %v1192
  %v1380 = vpop.f32.mrb[0].mxu0
  %v1381 = vadd.f32 %v1145, %v1380
  %v1382 = vpop.f32.mrb[0].mxu0
  %v1383 = vpop.f32.mrb[0].mxu0
  %v1384 = vadd.f32 %v1145, %v1383
  %v1385 = vpop.f32.mrb[0].mxu0
  %1386 = vmatprep.mubr.bf16.mxu0 0
  %1387 = vmatmul.mubr.bf16.gmra.mrb[0].mxu0 %v1195
  %v1388 = vpop.f32.mrb[0].mxu0
  %v1389 = vadd.f32 %v1145, %v1388
  %v1390 = vpop.f32.mrb[0].mxu0
  %v1391 = vpop.f32.mrb[0].mxu0
  %v1392 = vadd.f32 %v1145, %v1391
  %v1393 = vpop.f32.mrb[0].mxu0
  %1394 = vmatprep.mubr.bf16.mxu0 0
  %1395 = vmatmul.mubr.bf16.gmra.mrb[0].mxu0 %v1198
  %v1396 = vpop.f32.mrb[0].mxu0
  %v1397 = vadd.f32 %v1145, %v1396
  %v1398 = vpop.f32.mrb[0].mxu0
  %v1399 = vpop.f32.mrb[0].mxu0
  %v1400 = vadd.f32 %v1145, %v1399
  %v1401 = vpop.f32.mrb[0].mxu0
  %1402 = vmatprep.mubr.bf16.mxu0 0
  %1403 = vmatmul.mubr.bf16.gmra.mrb[0].mxu0 %v1201
  %v1404 = vpop.f32.mrb[0].mxu0
  %v1405 = vadd.f32 %v1145, %v1404
  %v1406 = vpop.f32.mrb[0].mxu0
  %v1407 = vpop.f32.mrb[0].mxu0
  %v1408 = vadd.f32 %v1145, %v1407
  %v1409 = vpop.f32.mrb[0].mxu0
  %1410 = vmatprep.mubr.bf16.mxu0 0
  %1411 = vmatmul.mubr.bf16.gmra.mrb[0].mxu0 %v1204
  %v1412 = vpop.f32.mrb[0].mxu0
  %v1413 = vadd.f32 %v1145, %v1412
  %v1414 = vpop.f32.mrb[0].mxu0
  %v1415 = vpop.f32.mrb[0].mxu0
  %v1416 = vadd.f32 %v1145, %v1415
  %v1417 = vpop.f32.mrb[0].mxu0
  %1418 = vmatprep.mubr.bf16.mxu0 0
  %1419 = vmatmul.mubr.bf16.gmra.mrb[0].mxu0 %v1207
  %v1420 = vpop.f32.mrb[0].mxu0
  %v1421 = vadd.f32 %v1145, %v1420
  %v1422 = vpop.f32.mrb[0].mxu0
  %v1423 = vpop.f32.mrb[0].mxu0
  %v1424 = vadd.f32 %v1145, %v1423
  %v1425 = vpop.f32.mrb[0].mxu0
  %1426 = vmatprep.mubr.bf16.mxu0 0
  %1427 = vmatmul.mubr.bf16.gmra.mrb[0].mxu0 %v1210
  %v1428 = vpop.f32.mrb[0].mxu0
  %v1429 = vadd.f32 %v1145, %v1428
  %v1430 = vpop.f32.mrb[0].mxu0
  %v1431 = vpop.f32.mrb[0].mxu0
  %v1432 = vadd.f32 %v1145, %v1431
  %v1433 = vpop.f32.mrb[0].mxu0
  %1434 = vmatprep.mubr.bf16.mxu0 0
  %1435 = vmatmul.mubr.bf16.gmra.mrb[0].mxu0 %v1213
  %v1436 = vpop.f32.mrb[0].mxu0
  %v1437 = vadd.f32 %v1145, %v1436
  %v1438 = vpop.f32.mrb[0].mxu0
  %v1439 = vpop.f32.mrb[0].mxu0
  %v1440 = vadd.f32 %v1145, %v1439
  %v1441 = vpop.f32.mrb[0].mxu0
  %1442 = vmatprep.mubr.bf16.mxu0 0
  %1443 = vmatmul.mubr.bf16.gmra.mrb[0].mxu0 %v1216
  %v1444 = vpop.f32.mrb[0].mxu0
  %v1445 = vadd.f32 %v1145, %v1444
  %v1446 = vpop.f32.mrb[0].mxu0
  %v1447 = vpop.f32.mrb[0].mxu0
  %v1448 = vadd.f32 %v1145, %v1447
  %v1449 = vpop.f32.mrb[0].mxu0
  %1450 = vmatprep.mubr.bf16.mxu0 0
  %1451 = vmatmul.mubr.bf16.gmra.mrb[0].mxu0 %v1219
  %v1452 = vpop.f32.mrb[0].mxu0
  %v1453 = vadd.f32 %v1145, %v1452
  %v1454 = vpop.f32.mrb[0].mxu0
  %v1455 = vpop.f32.mrb[0].mxu0
  %v1456 = vadd.f32 %v1145, %v1455
  %v1457 = vpop.f32.mrb[0].mxu0
  %1458 = vmatprep.mubr.bf16.mxu0 0
  %1459 = vmatmul.mubr.bf16.gmra.mrb[0].mxu0 %v1222
  %v1460 = vpop.f32.mrb[0].mxu0
  %v1461 = vadd.f32 %v1145, %v1460
  %v1462 = vpop.f32.mrb[0].mxu0
  %v1463 = vpop.f32.mrb[0].mxu0
  %v1464 = vadd.f32 %v1145, %v1463
  %v1465 = vpop.f32.mrb[0].mxu0
  %1466 = vmatprep.mubr.bf16.mxu0 0
  %1467 = vmatmul.mubr.bf16.gmra.mrb[0].mxu0 %v1225
  %v1468 = vpop.f32.mrb[0].mxu0
  %v1469 = vadd.f32 %v1145, %v1468
  %v1470 = vpop.f32.mrb[0].mxu0
  %v1471 = vpop.f32.mrb[0].mxu0
  %v1472 = vadd.f32 %v1145, %v1471
  %v1473 = vpop.f32.mrb[0].mxu0
  %1474 = vmatprep.mubr.bf16.mxu0 0
  %1475 = vmatmul.mubr.bf16.gmra.mrb[0].mxu0 %v1228
  %v1476 = vpop.f32.mrb[0].mxu0
  %v1477 = vadd.f32 %v1145, %v1476
  %v1478 = vpop.f32.mrb[0].mxu0
  %v1479 = vpop.f32.mrb[0].mxu0
  %v1480 = vadd.f32 %v1145, %v1479
  %v1481 = vpop.f32.mrb[0].mxu0
  %1482 = vmatprep.mubr.bf16.mxu0 0
  %1483 = vmatmul.mubr.bf16.gmra.mrb[0].mxu0 %v1231
  %v1484 = vpop.f32.mrb[0].mxu0
  %v1485 = vadd.f32 %v1145, %v1484
  %v1486 = vpop.f32.mrb[0].mxu0
  %v1487 = vpop.f32.mrb[0].mxu0
  %v1488 = vadd.f32 %v1145, %v1487
  %v1489 = vpop.f32.mrb[0].mxu0
  %1490 = vmatprep.mubr.bf16.mxu0 0
  %1491 = vmatmul.mubr.bf16.gmra.mrb[0].mxu0 %v1234
  %v1492 = vpop.f32.mrb[0].mxu0
  %v1493 = vadd.f32 %v1145, %v1492
  %v1494 = vpop.f32.mrb[0].mxu0
  %v1495 = vpop.f32.mrb[0].mxu0
  %v1496 = vadd.f32 %v1145, %v1495
  %v1497 = vpop.f32.mrb[0].mxu0
  %1498 = vmatprep.mubr.bf16.mxu0 0
  %1499 = vmatmul.mubr.bf16.gmra.mrb[0].mxu0 %v1237
  %v1500 = vpop.f32.mrb[0].mxu0
  %v1501 = vadd.f32 %v1145, %v1500
  %v1502 = vpop.f32.mrb[0].mxu0
  %v1503 = vpop.f32.mrb[0].mxu0
  %v1504 = vadd.f32 %v1145, %v1503
  %v1505 = vpop.f32.mrb[0].mxu0
  %1506 = vmatprep.mubr.bf16.mxu0 0
  %1507 = vmatmul.mubr.bf16.gmra.mrb[0].mxu0 %v1240
  %v1508 = vpop.f32.mrb[0].mxu0
  %v1509 = vadd.f32 %v1145, %v1508
  %v1510 = vpop.f32.mrb[0].mxu0
  %v1511 = vpop.f32.mrb[0].mxu0
  %v1512 = vadd.f32 %v1145, %v1511
  %v1513 = vpop.f32.mrb[0].mxu0
  %1514 = vmatprep.mubr.bf16.mxu0 0
  %1515 = vmatmul.mubr.bf16.gmra.mrb[0].mxu0 %v1243
  %v1516 = vpop.f32.mrb[0].mxu0
  %v1517 = vadd.f32 %v1145, %v1516
  %v1518 = vpop.f32.mrb[0].mxu0
  %v1519 = vpop.f32.mrb[0].mxu0
  %v1520 = vadd.f32 %v1145, %v1519
  %v1521 = vpop.f32.mrb[0].mxu0
  %1522 = vmatprep.mubr.bf16.mxu0 0
  %1523 = vmatmul.mubr.bf16.gmra.mrb[0].mxu0 %v1246
  %v1524 = vpop.f32.mrb[0].mxu0
  %v1525 = vadd.f32 %v1145, %v1524
  %v1526 = vpop.f32.mrb[0].mxu0
  %v1527 = vpop.f32.mrb[0].mxu0
  %v1528 = vadd.f32 %v1145, %v1527
  %v1529 = vpop.f32.mrb[0].mxu0
  %1530 = vmatprep.mubr.bf16.mxu0 0
  %1531 = vmatmul.mubr.bf16.gmra.mrb[0].mxu0 %v1249
  %v1532 = vpop.f32.mrb[0].mxu0
  %v1533 = vadd.f32 %v1145, %v1532
  %v1534 = vpop.f32.mrb[0].mxu0
  %v1535 = vpop.f32.mrb[0].mxu0
  %v1536 = vadd.f32 %v1145, %v1535
  %v1537 = vpop.f32.mrb[0].mxu0
  %1538 = vmatprep.mubr.bf16.mxu0 0
  %1539 = vmatmul.mubr.bf16.gmra.mrb[0].mxu0 %v1252
  %v1540 = vpop.f32.mrb[0].mxu0
  %v1541 = vadd.f32 %v1145, %v1540
  %v1542 = vpop.f32.mrb[0].mxu0
  %v1543 = vpop.f32.mrb[0].mxu0
  %v1544 = vadd.f32 %v1145, %v1543
  %v1545 = vpop.f32.mrb[0].mxu0
  %1546 = vdwg.mxu0
  %1547 = vst.msk [vmem:[%s3] sm:$0xff] %vm79, %v1293
  %1548 = vst.msk [vmem:[%s3 + $0x8] sm:$0xff] %vm79, %v1296
  %1549 = vst.msk [vmem:[%s3 + $0x10] sm:$0xff] %vm79, %v1301
  %1550 = vst.msk [vmem:[%s3 + $0x18] sm:$0xff] %vm79, %v1304
  %1551 = vst.msk [vmem:[%s3 + $0x20] sm:$0xff] %vm79, %v1309
  %1552 = vst.msk [vmem:[%s3 + $0x28] sm:$0xff] %vm79, %v1312
  %1553 = vst.msk [vmem:[%s3 + $0x30] sm:$0xff] %vm79, %v1317
  %1554 = vst.msk [vmem:[%s3 + $0x38] sm:$0xff] %vm79, %v1320
  %1555 = vst.msk [vmem:[%s3 + $0x40] sm:$0xff] %vm79, %v1325
  %1556 = vst.msk [vmem:[%s3 + $0x48] sm:$0xff] %vm79, %v1328
  %1557 = vst.msk [vmem:[%s3 + $0x50] sm:$0xff] %vm79, %v1333
  %1558 = vst.msk [vmem:[%s3 + $0x58] sm:$0xff] %vm79, %v1336
  %1559 = vst.msk [vmem:[%s3 + $0x60] sm:$0xff] %vm79, %v1341
  %1560 = vst.msk [vmem:[%s3 + $0x68] sm:$0xff] %vm79, %v1344
  %1561 = vst.msk [vmem:[%s3 + $0x70] sm:$0xff] %vm79, %v1349
  %1562 = vst.msk [vmem:[%s3 + $0x78] sm:$0xff] %vm79, %v1352
  %1563 = vst.msk [vmem:[%s3 + $0x80] sm:$0xff] %vm79, %v1357
  %1564 = vst.msk [vmem:[%s3 + $0x88] sm:$0xff] %vm79, %v1360
  %1565 = vst.msk [vmem:[%s3 + $0x90] sm:$0xff] %vm79, %v1365
  %1566 = vst.msk [vmem:[%s3 + $0x98] sm:$0xff] %vm79, %v1368
  %1567 = vst.msk [vmem:[%s3 + $0xa0] sm:$0xff] %vm79, %v1373
  %1568 = vst.msk [vmem:[%s3 + $0xa8] sm:$0xff] %vm79, %v1376
  %1569 = vst.msk [vmem:[%s3 + $0xb0] sm:$0xff] %vm79, %v1381
  %1570 = vst.msk [vmem:[%s3 + $0xb8] sm:$0xff] %vm79, %v1384
  %1571 = vst.msk [vmem:[%s3 + $0xc0] sm:$0xff] %vm79, %v1389
  %1572 = vst.msk [vmem:[%s3 + $0xc8] sm:$0xff] %vm79, %v1392
  %1573 = vst.msk [vmem:[%s3 + $0xd0] sm:$0xff] %vm79, %v1397
  %1574 = vst.msk [vmem:[%s3 + $0xd8] sm:$0xff] %vm79, %v1400
  %1575 = vst.msk [vmem:[%s3 + $0xe0] sm:$0xff] %vm79, %v1405
  %1576 = vst.msk [vmem:[%s3 + $0xe8] sm:$0xff] %vm79, %v1408
  %1577 = vst.msk [vmem:[%s3 + $0xf0] sm:$0xff] %vm79, %v1413
  %1578 = vst.msk [vmem:[%s3 + $0xf8] sm:$0xff] %vm79, %v1416
  %1579 = vst.msk [vmem:[%s3 + $0x100] sm:$0xff] %vm79, %v1421
  %1580 = vst.msk [vmem:[%s3 + $0x108] sm:$0xff] %vm79, %v1424
  %1581 = vst.msk [vmem:[%s3 + $0x110] sm:$0xff] %vm79, %v1429
  %1582 = vst.msk [vmem:[%s3 + $0x118] sm:$0xff] %vm79, %v1432
  %1583 = vst.msk [vmem:[%s3 + $0x120] sm:$0xff] %vm79, %v1437
  %1584 = vst.msk [vmem:[%s3 + $0x128] sm:$0xff] %vm79, %v1440
  %1585 = vst.msk [vmem:[%s3 + $0x130] sm:$0xff] %vm79, %v1445
  %1586 = vst.msk [vmem:[%s3 + $0x138] sm:$0xff] %vm79, %v1448
  %1587 = vst.msk [vmem:[%s3 + $0x140] sm:$0xff] %vm79, %v1453
  %1588 = vst.msk [vmem:[%s3 + $0x148] sm:$0xff] %vm79, %v1456
  %1589 = vst.msk [vmem:[%s3 + $0x150] sm:$0xff] %vm79, %v1461
  %1590 = vst.msk [vmem:[%s3 + $0x158] sm:$0xff] %vm79, %v1464
  %1591 = vst.msk [vmem:[%s3 + $0x160] sm:$0xff] %vm79, %v1469
  %1592 = vst.msk [vmem:[%s3 + $0x168] sm:$0xff] %vm79, %v1472
  %1593 = vst.msk [vmem:[%s3 + $0x170] sm:$0xff] %vm79, %v1477
  %1594 = vst.msk [vmem:[%s3 + $0x178] sm:$0xff] %vm79, %v1480
  %1595 = vst.msk [vmem:[%s3 + $0x180] sm:$0xff] %vm79, %v1485
  %1596 = vst.msk [vmem:[%s3 + $0x188] sm:$0xff] %vm79, %v1488
  %1597 = vst.msk [vmem:[%s3 + $0x190] sm:$0xff] %vm79, %v1493
  %1598 = vst.msk [vmem:[%s3 + $0x198] sm:$0xff] %vm79, %v1496
  %1599 = vst.msk [vmem:[%s3 + $0x1a0] sm:$0xff] %vm79, %v1501
  %1600 = vst.msk [vmem:[%s3 + $0x1a8] sm:$0xff] %vm79, %v1504
  %1601 = vst.msk [vmem:[%s3 + $0x1b0] sm:$0xff] %vm79, %v1509
  %1602 = vst.msk [vmem:[%s3 + $0x1b8] sm:$0xff] %vm79, %v1512
  %1603 = vst.msk [vmem:[%s3 + $0x1c0] sm:$0xff] %vm79, %v1517
  %1604 = vst.msk [vmem:[%s3 + $0x1c8] sm:$0xff] %vm79, %v1520
  %1605 = vst.msk [vmem:[%s3 + $0x1d0] sm:$0xff] %vm79, %v1525
  %1606 = vst.msk [vmem:[%s3 + $0x1d8] sm:$0xff] %vm79, %v1528
  %1607 = vst.msk [vmem:[%s3 + $0x1e0] sm:$0xff] %vm79, %v1533
  %1608 = vst.msk [vmem:[%s3 + $0x1e8] sm:$0xff] %vm79, %v1536
  %1609 = vst.msk [vmem:[%s3 + $0x1f0] sm:$0xff] %vm79, %v1541
  %1610 = vst.msk [vmem:[%s3 + $0x1f8] sm:$0xff] %vm79, %v1544
  // Predicated region
  $region14: #{tpu_custom_call.1} parent=0 // pred_check
    _
  $region15: #{tpu_custom_call.1} parent=0 // pred_check_branch
    %1612 = sbr.rel (0) target = $region17
  $region16: #{tpu_custom_call.1} parent=0 // pred_region
    _
  $region17: #{tpu_custom_call.1} parent=0 // pred_fallthru
    _
  // Predicated region
  $region18: #{tpu_custom_call.1} parent=0 // pred_check
    _
  $region19: #{tpu_custom_call.1} parent=0 // pred_check_branch
    %1614 = sbr.rel (0) target = $region21
  $region20: #{tpu_custom_call.1} parent=0 // pred_region
    _
  $region21: #{tpu_custom_call.1} parent=0 // pred_fallthru
    _

</llo_original>
